<compile_context>
chip_gen: v7x
topology: tpu7x:2x2x1
jax: 0.10.0
libtpu: 0.0.40
codegen_flags: <defaults>
</compile_context>

<pallas_src>
import functools

import jax
import jax.numpy as jnp
import numpy as np
from jax import lax
from jax.experimental import pallas as pl
from jax.experimental.pallas import tpu as pltpu


# ----------------------------------------------------------------------------
# Pallas kernel: one (Cout tile) x (band of TM output rows) per grid step.
# Single fused GEMM over the whole KH*KW*Cg contraction.
# ----------------------------------------------------------------------------
def _conv_band_kernel(x_ref, w_ref, b_ref, o_ref, *,
                      KH, KW, SH, SW, DH, DW, TM, OW):
    # x_ref : [B_in, Wp, Cg]        input row band for this (g, n, band)
    # w_ref : [KH*KW*Cg, TN]        weight slab (resident across inner axes)
    # b_ref : [1, TN] fp32          bias row     (resident across inner axes)
    # o_ref : [TM*OW, TN]           output tile
    band = x_ref[...]                                    # [B_in, Wp, Cg]
    taps = []
    for kh in range(KH):                                 # static, unrolled
        r0 = kh * DH
        for kw in range(KW):
            c0 = kw * DW
            # TODO(synk): for SH/SW > 1 a DMA-time (wrapper) column/row
            # compaction would avoid in-kernel strided slices; stride 1 (the
            # common case) is a plain static slice.
            taps.append(band[r0:r0 + (TM - 1) * SH + 1:SH,
                             c0:c0 + (OW - 1) * SW + 1:SW, :])   # [TM, OW, Cg]
    patch = taps[0] if len(taps) == 1 else jnp.concatenate(taps, axis=-1)
    patch = patch.reshape(TM * OW, patch.shape[-1])      # [M, KH*KW*Cg]
    acc = jnp.dot(patch, w_ref[...], preferred_element_type=jnp.float32)
    o_ref[...] = (acc + b_ref[...]).astype(o_ref.dtype)


# ----------------------------------------------------------------------------
# Wrapper: layout plumbing (NCHW<->NHWC, row banding, group split, lane pad)
# + one fused pallas_call for all groups.
# ----------------------------------------------------------------------------
@functools.partial(jax.jit, static_argnames=("stride", "padding", "dilation",
                                             "groups", "compute_dtype"))
def conv2d_forward(x, weight, bias, *, stride, padding, dilation, groups,
                   compute_dtype=None):
    N, Cin, H, W = x.shape
    Cout, Cg, KH, KW = weight.shape
    SH, SW = stride
    PH, PW = padding
    DH, DW = dilation
    G = groups
    Cog = Cout // G
    assert Cg == Cin // G

    OH = (H + 2 * PH - DH * (KH - 1) - 1) // SH + 1
    OW = (W + 2 * PW - DW * (KW - 1) - 1) // SW + 1
    Wp = W + 2 * PW

    # MXU operand dtype (fp32 accumulate regardless).  "bfloat16" recommended
    # on v5e (bf16-only MXU) and halves HBM/VMEM traffic everywhere.
    cdt = jnp.dtype(compute_dtype) if compute_dtype is not None else jnp.dtype(x.dtype)
    itemsize = cdt.itemsize

    # ---- tile sizes (cross-generation safe: <= ~8 MiB double-buffered) -----
    COp = ((Cog + 127) // 128) * 128          # lane-dense Cout per group
    TN = 128
    for cand in (512, 256):
        if COp % cand == 0 and KH * KW * Cg * cand * itemsize <= (4 << 20):
            TN = cand
            break
    n_co = COp // TN
    # TODO(synk): for very large Cg (>=512 with big TN) a Cin-reduction grid
    # axis would shrink the weight slab further; not needed at these sizes.

    def band_rows(tm):
        return (tm - 1) * SH + DH * (KH - 1) + 1

    TM = max(1, min(OH, (256 + OW - 1) // OW))            # GEMM M ~ 256
    while TM > 1 and band_rows(TM) * Wp * Cg * itemsize > (4 << 20):
        TM -= 1
    for _ in range(8):                                     # prefer M % 8 == 0
        if (TM * OW) % 8 == 0 or TM >= OH:
            break
        TM += 1
    n_bands = (OH + TM - 1) // TM
    OH_pad = n_bands * TM
    B_in = band_rows(TM)
    M = TM * OW

    # ---- input: NCHW -> NHWC, spatial zero pad, overlapping row bands ------
    x_nhwc = jnp.transpose(x, (0, 2, 3, 1))
    Hp_need = (OH_pad - 1) * SH + DH * (KH - 1) + 1
    bot_pad = max(PH, Hp_need - H - PH)
    x_pad = jnp.pad(x_nhwc, ((0, 0), (PH, bot_pad), (PW, PW), (0, 0)))
    bands = [lax.slice_in_dim(x_pad, t * TM * SH, t * TM * SH + B_in, axis=1)
             for t in range(n_bands)]
    x_b = jnp.stack(bands, axis=1)                         # [N, nb, B_in, Wp, Cin]
    x_b = x_b.reshape(N, n_bands, B_in, Wp, G, Cg)
    x_g = jnp.transpose(x_b, (4, 0, 1, 2, 3, 5)).astype(cdt)
    # x_g: [G, N, n_bands, B_in, Wp, Cg]

    # ---- weights: [Cout, Cg, KH, KW] -> [G, KH*KW*Cg, COp] (lane-dense) ----
    KC = KH * KW * Cg
    w_r = weight.reshape(G, Cog, Cg, KH, KW)
    w_r = jnp.transpose(w_r, (0, 3, 4, 2, 1)).reshape(G, KC, Cog)
    w_r = jnp.pad(w_r, ((0, 0), (0, 0), (0, COp - Cog))).astype(cdt)

    b = bias if bias is not None else jnp.zeros((Cout,), x.dtype)
    b_r = jnp.pad(b.astype(jnp.float32).reshape(G, 1, Cog),
                  ((0, 0), (0, 0), (0, COp - Cog)))        # [G, 1, COp] fp32

    # grid: (g, co) outermost so the weight/bias blocks stay resident in VMEM
    # across the inner (batch, row-band) sweep.  No reduction axis remains.
    grid = (G, n_co, N, n_bands)

    kernel = functools.partial(_conv_band_kernel, KH=KH, KW=KW, SH=SH, SW=SW,
                               DH=DH, DW=DW, TM=TM, OW=OW)

    out_bytes = G * N * n_bands * M * COp * jnp.dtype(x.dtype).itemsize
    cost = pl.CostEstimate(
        flops=2 * N * OH * OW * KH * KW * Cg * Cout,
        transcendentals=0,
        bytes_accessed=int(n_co * x_g.size * itemsize      # input once per Cout tile
                           + w_r.size * itemsize           # weights once per (g, co)
                           + b_r.size * 4
                           + out_bytes),                    # output written once
    )

    out = pl.pallas_call(
        kernel,
        out_shape=jax.ShapeDtypeStruct((G, N, n_bands, M, COp), x.dtype),
        grid_spec=pltpu.PrefetchScalarGridSpec(
            num_scalar_prefetch=0,
            grid=grid,
            in_specs=[
                # overlapping input row band for this (g, n, band)
                pl.BlockSpec((None, None, None, B_in, Wp, Cg),
                             lambda g, co, n, t: (g, n, t, 0, 0, 0)),
                # weight slab for this (g, co) -- resident across (n, t)
                pl.BlockSpec((None, KC, TN),
                             lambda g, co, n, t: (g, 0, co)),
                # bias row for this (g, co) -- resident across (n, t)
                pl.BlockSpec((None, 1, TN),
                             lambda g, co, n, t: (g, 0, co)),
            ],
            out_specs=pl.BlockSpec((None, None, None, M, TN),
                                   lambda g, co, n, t: (g, n, t, 0, co)),
        ),
        compiler_params=pltpu.CompilerParams(
            dimension_semantics=("parallel", "parallel", "parallel", "parallel")),
        cost_estimate=cost,
    )(x_g, w_r, b_r)

    # [G, N, n_bands, TM*OW, COp] -> drop row / channel padding -> NCHW
    y = out.reshape(G, N, OH_pad, OW, COp)[:, :, :OH, :, :Cog]
    y = jnp.transpose(y, (1, 2, 3, 0, 4)).reshape(N, OH, OW, Cout)
    return jnp.transpose(y, (0, 3, 1, 2))                  # NCHW, dtype == x.dtype


# ----------------------------------------------------------------------------
# Module wrapper mirroring _IPEXConvNd's forward.
# ----------------------------------------------------------------------------
class IPEXConv2d:
    """JAX/Pallas equivalent of _IPEXConvNd.forward for 2-D convolution."""
    # TODO(synk): the ipex prepack ctx (blocked/oneDNN weight layout) and its
    # state_dict round-tripping have no Pallas equivalent; only the forward
    # (convolution_forward) is implemented, on a plain [G, KH*KW*Cin_g, Cout]
    # GEMM-friendly weight layout.

    def __init__(self, in_channels, out_channels, kernel_size,
                 stride=(1, 1), padding=(0, 0), dilation=(1, 1), groups=1,
                 bias=True, key=None, dtype=jnp.float32):
        self.in_channels = in_channels
        self.out_channels = out_channels
        self.kernel_size = kernel_size
        self.stride = tuple(stride)
        self.padding = tuple(padding)
        self.dilation = tuple(dilation)
        self.groups = groups

        if key is None:
            key = jax.random.PRNGKey(0)
        kw_, kb_ = jax.random.split(key)
        fan_in = (in_channels // groups) * kernel_size[0] * kernel_size[1]
        bound = 1.0 / np.sqrt(fan_in)
        # weight layout matches PyTorch: [Cout, Cin/groups, KH, KW]
        self.weight = jax.random.uniform(
            kw_, (out_channels, in_channels // groups, *kernel_size),
            dtype=dtype, minval=-bound, maxval=bound)
        if bias:
            self.bias = jax.random.uniform(
                kb_, (out_channels,), dtype=dtype, minval=-bound, maxval=bound)
        else:
            self.bias = jnp.zeros((out_channels,), dtype=dtype)

    def __call__(self, x):
        return conv2d_forward(x, self.weight, self.bias,
                              stride=self.stride, padding=self.padding,
                              dilation=self.dilation, groups=self.groups)


# ----------------------------------------------------------------------------
# Driver
# ----------------------------------------------------------------------------
if __name__ == "__main__":
    key = jax.random.PRNGKey(0)
    kx, kp = jax.random.split(key)

    # Small shapes: N=2, Cin=4, H=W=16, Cout=8, 3x3 kernel, stride 1, pad 1.
    N, Cin, H, W = 2, 4, 16, 16
    Cout, KH, KW = 8, 3, 3

    x = jax.random.normal(kx, (N, Cin, H, W), dtype=jnp.float32)

    conv = IPEXConv2d(Cin, Cout, (KH, KW), stride=(1, 1), padding=(1, 1),
                      dilation=(1, 1), groups=1, bias=True, key=kp)

    y = conv(x)
    y = jax.block_until_ready(y)

    # Reference check against XLA's conv (NCHW / OIHW).
    y_ref = lax.conv_general_dilated(
        x, conv.weight,
        window_strides=conv.stride,
        padding=[(conv.padding[0], conv.padding[0]),
                 (conv.padding[1], conv.padding[1])],
        rhs_dilation=conv.dilation,
        dimension_numbers=("NCHW", "OIHW", "NCHW"),
        feature_group_count=conv.groups,
    ) + conv.bias.reshape(1, -1, 1, 1)

    assert y.shape == (N, Cout, H, W), y.shape
    np.testing.assert_allclose(np.asarray(y), np.asarray(y_ref),
                               rtol=1e-4, atol=1e-4)
    print("KERNEL_OK")
</pallas_src>

<mosaic_0001>
module attributes {stable_mosaic.version = 11 : i64} {
  func.func @_conv_band_kernel(%arg0: i32, %arg1: i32, %arg2: i32, %arg3: i32, %arg4: memref<1x1x1x18x18x4xf32, #tpu.memory_space<vmem>>, %arg5: memref<1x36x128xf32, #tpu.memory_space<vmem>>, %arg6: memref<1x1x128xf32, #tpu.memory_space<vmem>>, %arg7: memref<1x1x1x256x128xf32, #tpu.memory_space<vmem>>) attributes {dimension_semantics = [#tpu.dimension_semantics<parallel>, #tpu.dimension_semantics<parallel>, #tpu.dimension_semantics<parallel>, #tpu.dimension_semantics<parallel>], iteration_bounds = array<i64: 1, 1, 2, 1>, scalar_prefetch = 0 : i64, scratch_operands = 0 : i64, tpu.core_type = #tpu.core_type<tc>, window_params = [{transform_indices = @transform_0, window_bounds = array<i64: 1, 1, 1, 18, 18, 4>}, {transform_indices = @transform_1, window_bounds = array<i64: 1, 36, 128>}, {transform_indices = @transform_2, window_bounds = array<i64: 1, 1, 128>}, {transform_indices = @transform_3, window_bounds = array<i64: 1, 1, 1, 256, 128>}]} {
    %c0 = arith.constant 0 : index
    %c0_0 = arith.constant 0 : index
    %c0_1 = arith.constant 0 : index
    %c0_2 = arith.constant 0 : index
    %c0_3 = arith.constant 0 : index
    %c0_4 = arith.constant 0 : index
    %0 = vector.load %arg4[%c0, %c0_0, %c0_1, %c0_2, %c0_3, %c0_4] : memref<1x1x1x18x18x4xf32, #tpu.memory_space<vmem>>, vector<1x1x1x18x18x4xf32>
    %1 = vector.shape_cast %0 : vector<1x1x1x18x18x4xf32> to vector<18x18x4xf32>
    %2 = vector.extract_strided_slice %1 {offsets = [0, 0, 0], sizes = [16, 16, 4], strides = [1, 1, 1]} : vector<18x18x4xf32> to vector<16x16x4xf32>
    %3 = vector.extract_strided_slice %1 {offsets = [0, 1, 0], sizes = [16, 16, 4], strides = [1, 1, 1]} : vector<18x18x4xf32> to vector<16x16x4xf32>
    %4 = vector.extract_strided_slice %1 {offsets = [0, 2, 0], sizes = [16, 16, 4], strides = [1, 1, 1]} : vector<18x18x4xf32> to vector<16x16x4xf32>
    %5 = vector.extract_strided_slice %1 {offsets = [1, 0, 0], sizes = [16, 16, 4], strides = [1, 1, 1]} : vector<18x18x4xf32> to vector<16x16x4xf32>
    %6 = vector.extract_strided_slice %1 {offsets = [1, 1, 0], sizes = [16, 16, 4], strides = [1, 1, 1]} : vector<18x18x4xf32> to vector<16x16x4xf32>
    %7 = vector.extract_strided_slice %1 {offsets = [1, 2, 0], sizes = [16, 16, 4], strides = [1, 1, 1]} : vector<18x18x4xf32> to vector<16x16x4xf32>
    %8 = vector.extract_strided_slice %1 {offsets = [2, 0, 0], sizes = [16, 16, 4], strides = [1, 1, 1]} : vector<18x18x4xf32> to vector<16x16x4xf32>
    %9 = vector.extract_strided_slice %1 {offsets = [2, 1, 0], sizes = [16, 16, 4], strides = [1, 1, 1]} : vector<18x18x4xf32> to vector<16x16x4xf32>
    %10 = vector.extract_strided_slice %1 {offsets = [2, 2, 0], sizes = [16, 16, 4], strides = [1, 1, 1]} : vector<18x18x4xf32> to vector<16x16x4xf32>
    %11 = tpu.concatenate %2, %3, %4, %5, %6, %7, %8, %9, %10 in 2 : vector<16x16x4xf32>, vector<16x16x4xf32>, vector<16x16x4xf32>, vector<16x16x4xf32>, vector<16x16x4xf32>, vector<16x16x4xf32>, vector<16x16x4xf32>, vector<16x16x4xf32>, vector<16x16x4xf32> -> vector<16x16x36xf32>
    %12 = vector.shape_cast %11 : vector<16x16x36xf32> to vector<256x36xf32>
    %c0_5 = arith.constant 0 : index
    %c0_6 = arith.constant 0 : index
    %c0_7 = arith.constant 0 : index
    %13 = vector.load %arg5[%c0_5, %c0_6, %c0_7] : memref<1x36x128xf32, #tpu.memory_space<vmem>>, vector<1x36x128xf32>
    %14 = vector.shape_cast %13 : vector<1x36x128xf32> to vector<36x128xf32>
    %cst = arith.constant dense<0.000000e+00> : vector<256x128xf32>
    %15 = tpu.matmul %12, %14, %cst {dimension_numbers = #tpu.dot_dimension_numbers<[1], [0], [0], [1], [0, 0, 1, 1], [], []>} : vector<256x36xf32>, vector<36x128xf32>, vector<256x128xf32> -> vector<256x128xf32>
    %c0_8 = arith.constant 0 : index
    %c0_9 = arith.constant 0 : index
    %c0_10 = arith.constant 0 : index
    %16 = vector.load %arg6[%c0_8, %c0_9, %c0_10] : memref<1x1x128xf32, #tpu.memory_space<vmem>>, vector<1x1x128xf32>
    %17 = vector.shape_cast %16 : vector<1x1x128xf32> to vector<1x128xf32>
    %18 = vector.broadcast %17 : vector<1x128xf32> to vector<256x128xf32>
    %19 = arith.addf %15, %18 : vector<256x128xf32>
    %c0_11 = arith.constant 0 : index
    %c0_12 = arith.constant 0 : index
    %c0_13 = arith.constant 0 : index
    %c0_14 = arith.constant 0 : index
    %c0_15 = arith.constant 0 : index
    %20 = vector.load %arg7[%c0_11, %c0_12, %c0_13, %c0_14, %c0_15] : memref<1x1x1x256x128xf32, #tpu.memory_space<vmem>>, vector<1x1x1x256x128xf32>
    %21 = vector.shape_cast %20 : vector<1x1x1x256x128xf32> to vector<256x128xf32>
    %22 = vector.shape_cast %19 : vector<256x128xf32> to vector<1x1x1x256x128xf32>
    tpu.vector_store %arg7[%c0_11, %c0_12, %c0_13, %c0_14, %c0_15], %22 {strides = array<i32>} : memref<1x1x1x256x128xf32, #tpu.memory_space<vmem>>, vector<1x1x1x256x128xf32>,
    return
  }
  func.func @transform_0(%arg0: i32, %arg1: i32, %arg2: i32, %arg3: i32) -> (i32, i32, i32, i32, i32, i32) {
    %c0_i32 = arith.constant 0 : i32
    %c0_i32_0 = arith.constant 0 : i32
    %c0_i32_1 = arith.constant 0 : i32
    %c0_i32_2 = arith.constant 0 : i32
    return %arg0, %arg2, %arg3, %c0_i32, %c0_i32_0, %c0_i32_1 : i32, i32, i32, i32, i32, i32
  }
  func.func @transform_1(%arg0: i32, %arg1: i32, %arg2: i32, %arg3: i32) -> (i32, i32, i32) {
    %c0_i32 = arith.constant 0 : i32
    %c0_i32_0 = arith.constant 0 : i32
    return %arg0, %c0_i32, %arg1 : i32, i32, i32
  }
  func.func @transform_2(%arg0: i32, %arg1: i32, %arg2: i32, %arg3: i32) -> (i32, i32, i32) {
    %c0_i32 = arith.constant 0 : i32
    %c0_i32_0 = arith.constant 0 : i32
    return %arg0, %c0_i32, %arg1 : i32, i32, i32
  }
  func.func @transform_3(%arg0: i32, %arg1: i32, %arg2: i32, %arg3: i32) -> (i32, i32, i32, i32, i32) {
    %c0_i32 = arith.constant 0 : i32
    %c0_i32_0 = arith.constant 0 : i32
    return %arg0, %arg2, %arg3, %c0_i32, %arg1 : i32, i32, i32, i32, i32
  }
}

</mosaic_0001>

<llo_original>
// kernel: conv2d_forward.1
$region0: #{conv2d_forward.1}
  #allocation0 [shape = 'u32[]', space=smem, size = 0x4, offset = 0x4, fixed_abs, tag = 'smem constant byte address 0x4 - core index']
  #allocation1 [shape = 'u32[144,128]{1,0:T(1,128)}', space=vmem, size = 0x12000, scoped, tag = 'internal scratch']
  %s0 = inlined_call_operand.vmem [shape: f32[1,2,1,18,18,4], index: 0, kind: input, shape index: {}]
  %s1 = inlined_call_operand.vmem [shape: f32[1,36,128], index: 1, kind: input, shape index: {}]
  %s2 = inlined_call_operand.vmem [shape: f32[1,1,128], index: 2, kind: input, shape index: {}]
  %s3 = inlined_call_operand.vmem [shape: f32[1,2,1,256,128], index: 3, kind: output, shape index: {}]
  %s4 = sld [smem:[#allocation0]]
  $region45: #{conv2d_forward.1} parent=0
    _
  %s6 = ssub.s32 1, %s4
  %s7 = scalar_select 0, %s6, %s4
  loop: start=0, step=1, limit=4
  $region2: #{conv2d_forward.1} parent=0 // loop_pre_header
    _
  $region3: #{conv2d_forward.1} parent=0 // loop_header
    %s9 = sphi 0, %s13
    %p10 = scmp.ge.s32.totalorder %s9, 4
    %s16 = sphi 0, %s42
    %s17 = sphi 0, %s38
    %s18 = sphi 0, %s34
    %s19 = sphi 0, %s30
    %s20 = sphi 0, %s16
    %s21 = sphi 0, %s17
    %s22 = sphi 0, %s18
    %s23 = sphi 0, %s19
    %s24 = sphi 0, %s20
    %s25 = sphi 0, %s21
    %s26 = sphi 0, %s22
    %s27 = sphi 0, %s23
    %s49 = sphi 0, %s51
    %s52 = sphi 0, %s49
    %s53 = sphi 0, %s52
    %s69 = sphi 0, %s53
    %s77 = sphi 0, %s79
    %s80 = sphi 0, %s77
    %s81 = sphi 0, %s80
    %s97 = sphi 0, %s81
    %s105 = sphi 0, %s107
    %s108 = sphi 0, %s105
    %s109 = sphi 0, %s108
    %s125 = sphi 0, %s109
    %s137 = sphi 0, %s139
    %s140 = sphi 0, %s137
    %s141 = sphi 0, %s140
    %s157 = sphi 0, %s141
  $region4: #{conv2d_forward.1} parent=0 // loop_header_branch
    %12 = sbr.rel (%p10) target = $region8
  $region5: #{conv2d_forward.1} parent=0 // loop_body
    %s14 = ssub.s32 %s9, 1
    %s15 = ssub.s32 %s9, 2
    %s28 = sadd.s32 1, %s19
    %p29 = scmp.ge.s32.totalorder %s28, 1
    %s30 = scalar_select %p29, 0, %s28
    %s31 = sadd.s32 1, %s18
    %s32 = scalar_select %p29, %s31, %s18
    %p33 = scmp.ge.s32.totalorder %s32, 2
    %s34 = scalar_select %p33, 0, %s32
    %s35 = sadd.s32 1, %s17
    %s36 = scalar_select %p33, %s35, %s17
    %p37 = scmp.ge.s32.totalorder %s36, 1
    %s38 = scalar_select %p37, 0, %s36
    %s39 = sadd.s32 1, %s16
    %s40 = scalar_select %p37, %s39, %s16
    %p41 = scmp.ge.s32.totalorder %s40, 1
    %s42 = scalar_select %p41, 0, %s40
    %s43 = ssub.s32 %s16, %s42
    %s44 = ssub.s32 %s18, %s34
    %s45 = sor.u32 %s43, %s44
    %s46 = ssub.s32 %s19, %s30
    %s47 = sor.u32 %s45, %s46
    %p48 = scmp.eq.s32.totalorder %s47, 0
    %s50 = sadd.s32 %s49, 1
    %s51 = scalar_select %p48, %s49, %s50
    %p54 = pneg %p48
    %p55 = scmp.eq.s32.totalorder %s9, 1
    %p56 = por %p54, %p55
    %p57 = scmp.ne.s32.totalorder %s49, %s52
    %p58 = scmp.eq.s32.totalorder %s9, 0
    %p59 = por %p57, %p58
    %p60 = scmp.ne.s32.totalorder %s49, %s52
    %p61 = scmp.eq.s32.totalorder %s14, 1
    %p62 = por %p60, %p61
    %p63 = scmp.ne.s32.totalorder %s52, %s53
    %p64 = scmp.eq.s32.totalorder %s14, 0
    %p65 = por %p63, %p64
    %p66 = scmp.ne.s32.totalorder %s52, %s53
    %p67 = scmp.eq.s32.totalorder %s15, 1
    %p68 = por %p66, %p67
    %p70 = scmp.ne.s32.totalorder %s53, %s69
    %p71 = scmp.eq.s32.totalorder %s15, 0
    %p72 = por %p70, %p71
    %s73 = ssub.s32 %s16, %s42
    %s74 = ssub.s32 %s17, %s38
    %s75 = sor.u32 %s73, %s74
    %p76 = scmp.eq.s32.totalorder %s75, 0
    %s78 = sadd.s32 %s77, 1
    %s79 = scalar_select %p76, %s77, %s78
    %p82 = pneg %p76
    %p83 = scmp.eq.s32.totalorder %s9, 1
    %p84 = por %p82, %p83
    %p85 = scmp.ne.s32.totalorder %s77, %s80
    %p86 = scmp.eq.s32.totalorder %s9, 0
    %p87 = por %p85, %p86
    %p88 = scmp.ne.s32.totalorder %s77, %s80
    %p89 = scmp.eq.s32.totalorder %s14, 1
    %p90 = por %p88, %p89
    %p91 = scmp.ne.s32.totalorder %s80, %s81
    %p92 = scmp.eq.s32.totalorder %s14, 0
    %p93 = por %p91, %p92
    %p94 = scmp.ne.s32.totalorder %s80, %s81
    %p95 = scmp.eq.s32.totalorder %s15, 1
    %p96 = por %p94, %p95
    %p98 = scmp.ne.s32.totalorder %s81, %s97
    %p99 = scmp.eq.s32.totalorder %s15, 0
    %p100 = por %p98, %p99
    %s101 = ssub.s32 %s16, %s42
    %s102 = ssub.s32 %s17, %s38
    %s103 = sor.u32 %s101, %s102
    %p104 = scmp.eq.s32.totalorder %s103, 0
    %s106 = sadd.s32 %s105, 1
    %s107 = scalar_select %p104, %s105, %s106
    %p110 = pneg %p104
    %p111 = scmp.eq.s32.totalorder %s9, 1
    %p112 = por %p110, %p111
    %p113 = scmp.ne.s32.totalorder %s105, %s108
    %p114 = scmp.eq.s32.totalorder %s9, 0
    %p115 = por %p113, %p114
    %p116 = scmp.ne.s32.totalorder %s105, %s108
    %p117 = scmp.eq.s32.totalorder %s14, 1
    %p118 = por %p116, %p117
    %p119 = scmp.ne.s32.totalorder %s108, %s109
    %p120 = scmp.eq.s32.totalorder %s14, 0
    %p121 = por %p119, %p120
    %p122 = scmp.ne.s32.totalorder %s108, %s109
    %p123 = scmp.eq.s32.totalorder %s15, 1
    %p124 = por %p122, %p123
    %p126 = scmp.ne.s32.totalorder %s109, %s125
    %p127 = scmp.eq.s32.totalorder %s15, 0
    %p128 = por %p126, %p127
    %s129 = ssub.s32 %s16, %s42
    %s130 = ssub.s32 %s18, %s34
    %s131 = sor.u32 %s129, %s130
    %s132 = ssub.s32 %s19, %s30
    %s133 = sor.u32 %s131, %s132
    %s134 = ssub.s32 %s17, %s38
    %s135 = sor.u32 %s133, %s134
    %p136 = scmp.eq.s32.totalorder %s135, 0
    %s138 = sadd.s32 %s137, 1
    %s139 = scalar_select %p136, %s137, %s138
    %p142 = pneg %p136
    %p143 = scmp.eq.s32.totalorder %s9, 1
    %p144 = por %p142, %p143
    %p145 = scmp.ne.s32.totalorder %s137, %s140
    %p146 = scmp.eq.s32.totalorder %s9, 0
    %p147 = por %p145, %p146
    %p148 = scmp.ne.s32.totalorder %s137, %s140
    %p149 = scmp.eq.s32.totalorder %s14, 1
    %p150 = por %p148, %p149
    %p151 = scmp.ne.s32.totalorder %s140, %s141
    %p152 = scmp.eq.s32.totalorder %s14, 0
    %p153 = por %p151, %p152
    %p154 = scmp.ne.s32.totalorder %s140, %s141
    %p155 = scmp.eq.s32.totalorder %s15, 1
    %p156 = por %p154, %p155
    %p158 = scmp.ne.s32.totalorder %s141, %s157
    %p159 = scmp.eq.s32.totalorder %s15, 0
    %p160 = por %p158, %p159
    %p161 = scmp.le.s32.totalorder 1, %s9
    %p162 = scmp.lt.s32.totalorder %s9, 3
    %p163 = pnand %p161, %p162
    %p164 = pneg %p163
    // Predicated region
    $region9: #{conv2d_forward.1} parent=5 // pred_check
      _
    $region10: #{conv2d_forward.1} parent=5 // pred_check_branch
      %166 = sbr.rel (%p163) target = $region12
    $region11: #{conv2d_forward.1} parent=5 // pred_region
      %s167 = ssub.s32 %s9, 1
      // Predicated region
      $region13: #{conv2d_forward.1} parent=11 // pred_check
        %p168 = pneg %p93
      $region14: #{conv2d_forward.1} parent=11 // pred_check_branch
        %170 = sbr.rel (%p168) target = $region16
      $region15: #{conv2d_forward.1} parent=11 // pred_region
        %p171 = scmp.lt.s32.totalorder %s20, 0
        %s172 = scalar_select %p171, %s20, 0
        %p173 = scmp.lt.s32.totalorder %s21, 0
        %s174 = scalar_select %p173, %s21, 0
        %s175 = smul.addr %s172, 5
        %s176 = sadd.s32 %s174, %s175
        %s177 = smul.addr %s176, 8
        %s178 = scalar_lea.vmem %s1, %s177
      $region16: #{conv2d_forward.1} parent=11 // pred_fallthru
        _
      // Predicated region
      $region17: #{conv2d_forward.1} parent=11 // pred_check
        %p179 = pneg %p121
      $region18: #{conv2d_forward.1} parent=11 // pred_check_branch
        %181 = sbr.rel (%p179) target = $region20
      $region19: #{conv2d_forward.1} parent=11 // pred_region
        %p182 = scmp.lt.s32.totalorder %s20, 0
        %s183 = scalar_select %p182, %s20, 0
        %p184 = scmp.lt.s32.totalorder %s21, 0
        %s185 = scalar_select %p184, %s21, 0
        %s186 = sadd.s32 %s185, %s183
        %s187 = scalar_lea.vmem %s2, %s186
      $region20: #{conv2d_forward.1} parent=11 // pred_fallthru
        _
    $region12: #{conv2d_forward.1} parent=5 // pred_fallthru
      _
    %p188 = scmp.lt.s32.totalorder %s9, 2
    // Predicated region
    $region21: #{conv2d_forward.1} parent=5 // pred_check
      %p189 = pneg %p188
    $region22: #{conv2d_forward.1} parent=5 // pred_check_branch
      %191 = sbr.rel (%p189) target = $region24
    $region23: #{conv2d_forward.1} parent=5 // pred_region
      // Predicated region
      $region25: #{conv2d_forward.1} parent=23 // pred_check
        %p192 = pneg %p59
      $region26: #{conv2d_forward.1} parent=23 // pred_check_branch
        %194 = sbr.rel (%p192) target = $region28
      $region27: #{conv2d_forward.1} parent=23 // pred_region
        %p195 = scmp.lt.s32.totalorder %s16, 0
        %s196 = scalar_select %p195, %s16, 0
        %p197 = scmp.lt.s32.totalorder %s18, 1
        %s198 = scalar_select %p197, %s18, 1
        %p199 = scmp.lt.s32.totalorder %s19, 0
        %s200 = scalar_select %p199, %s19, 0
        %s201 = smul.addr %s200, 54
        %s202 = smul.addr %s198, 54
        %s203 = sadd.s32 %s201, %s202
        %s204 = smul.addr %s196, 108
        %s205 = sadd.s32 %s203, %s204
        %s206 = smul.addr %s205, 8
        %s207 = scalar_lea.vmem %s0, %s206
      $region28: #{conv2d_forward.1} parent=23 // pred_fallthru
        _
    $region24: #{conv2d_forward.1} parent=5 // pred_fallthru
      _
    %p208 = scmp.le.s32.totalorder 1, %s9
    %p209 = scmp.lt.s32.totalorder %s9, 3
    %p210 = pnand %p208, %p209
    %p211 = pneg %p210
    // Predicated region
    $region29: #{conv2d_forward.1} parent=5 // pred_check
      _
    $region30: #{conv2d_forward.1} parent=5 // pred_check_branch
      %213 = sbr.rel (%p210) target = $region32
    $region31: #{conv2d_forward.1} parent=5 // pred_region
      %s214 = ssub.s32 %s9, 1
      %p215 = scmp.lt.s32.totalorder %s20, 0
      %s216 = scalar_select %p215, %s20, 0
      %p217 = scmp.lt.s32.totalorder %s22, 1
      %s218 = scalar_select %p217, %s22, 1
      %p219 = scmp.lt.s32.totalorder %s23, 0
      %s220 = scalar_select %p219, %s23, 0
      %s221 = smul.addr %s220, 54
      %s222 = smul.addr %s218, 54
      %s223 = sadd.s32 %s221, %s222
      %s224 = smul.addr %s216, 108
      %s225 = sadd.s32 %s223, %s224
      %s226 = smul.addr %s225, 8
      %s227 = scalar_lea.vmem %s0, %s226
      %p228 = pneg %p65
      %p229 = pneg %p62
      %p230 = scmp.lt.s32.totalorder %s20, 0
      %s231 = scalar_select %p230, %s20, 0
      %p232 = scmp.lt.s32.totalorder %s21, 0
      %s233 = scalar_select %p232, %s21, 0
      %s234 = smul.addr %s231, 5
      %s235 = sadd.s32 %s233, %s234
      %s236 = smul.addr %s235, 8
      %s237 = scalar_lea.vmem %s1, %s236
      %p238 = pneg %p93
      %p239 = pneg %p90
      %p240 = scmp.lt.s32.totalorder %s20, 0
      %s241 = scalar_select %p240, %s20, 0
      %p242 = scmp.lt.s32.totalorder %s21, 0
      %s243 = scalar_select %p242, %s21, 0
      %s244 = sadd.s32 %s243, %s241
      %s245 = scalar_lea.vmem %s2, %s244
      %p246 = pneg %p121
      %p247 = pneg %p118
      %p248 = pneg %p153
      %p249 = pneg %p150
      %p250 = scmp.lt.s32.totalorder %s20, 0
      %s251 = scalar_select %p250, %s20, 0
      %p252 = scmp.lt.s32.totalorder %s22, 1
      %s253 = scalar_select %p252, %s22, 1
      %p254 = scmp.lt.s32.totalorder %s23, 0
      %s255 = scalar_select %p254, %s23, 0
      %p256 = scmp.lt.s32.totalorder %s21, 0
      %s257 = scalar_select %p256, %s21, 0
      %s258 = smul.addr %s255, 32
      %s259 = sadd.s32 %s257, %s258
      %s260 = smul.addr %s253, 32
      %s261 = sadd.s32 %s259, %s260
      %s262 = smul.addr %s251, 64
      %s263 = sadd.s32 %s261, %s262
      %s264 = smul.addr %s263, 8
      %s265 = scalar_lea.vmem %s3, %s264
      %p266 = scmp.lt.s32.totalorder %s20, 0
      %s267 = scalar_select %p266, %s20, 0
      %p268 = scmp.lt.s32.totalorder %s22, 1
      %s269 = scalar_select %p268, %s22, 1
      %p270 = scmp.lt.s32.totalorder %s23, 0
      %s271 = scalar_select %p270, %s23, 0
      %s272 = smul.addr %s271, 54
      %s273 = smul.addr %s269, 54
      %s274 = sadd.s32 %s272, %s273
      %s275 = smul.addr %s267, 108
      %s276 = sadd.s32 %s274, %s275
      %s277 = smul.addr %s276, 8
      %s278 = scalar_lea.vmem %s0, %s277
      %p279 = scmp.lt.s32.totalorder %s20, 0
      %s280 = scalar_select %p279, %s20, 0
      %p281 = scmp.lt.s32.totalorder %s21, 0
      %s282 = scalar_select %p281, %s21, 0
      %s283 = smul.addr %s280, 5
      %s284 = sadd.s32 %s282, %s283
      %s285 = smul.addr %s284, 8
      %s286 = scalar_lea.vmem %s1, %s285
      %p287 = scmp.lt.s32.totalorder %s20, 0
      %s288 = scalar_select %p287, %s20, 0
      %p289 = scmp.lt.s32.totalorder %s21, 0
      %s290 = scalar_select %p289, %s21, 0
      %s291 = sadd.s32 %s290, %s288
      %s292 = scalar_lea.vmem %s2, %s291
      %p293 = scmp.lt.s32.totalorder %s20, 0
      %s294 = scalar_select %p293, %s20, 0
      %p295 = scmp.lt.s32.totalorder %s22, 1
      %s296 = scalar_select %p295, %s22, 1
      %p297 = scmp.lt.s32.totalorder %s23, 0
      %s298 = scalar_select %p297, %s23, 0
      %p299 = scmp.lt.s32.totalorder %s21, 0
      %s300 = scalar_select %p299, %s21, 0
      %s301 = smul.addr %s298, 32
      %s302 = sadd.s32 %s300, %s301
      %s303 = smul.addr %s296, 32
      %s304 = sadd.s32 %s302, %s303
      %s305 = smul.addr %s294, 64
      %s306 = sadd.s32 %s304, %s305
      %s307 = smul.addr %s306, 8
      %s308 = scalar_lea.vmem %s3, %s307
      %v309 = vld [vmem:[%s278] sm:$0xff]
      %v310 = vld [vmem:[%s278 + $0x8] sm:$0xff]
      %v311 = vld [vmem:[%s278 + $0x10] sm:$0x3]
      %v312 = vld [vmem:[%s278 + $0x18] sm:$0xff]
      %v313 = vld [vmem:[%s278 + $0x20] sm:$0xff]
      %v314 = vld [vmem:[%s278 + $0x28] sm:$0x3]
      %v315 = vld [vmem:[%s278 + $0x30] sm:$0xff]
      %v316 = vld [vmem:[%s278 + $0x38] sm:$0xff]
      %v317 = vld [vmem:[%s278 + $0x40] sm:$0x3]
      %v318 = vld [vmem:[%s278 + $0x48] sm:$0xff]
      %v319 = vld [vmem:[%s278 + $0x50] sm:$0xff]
      %v320 = vld [vmem:[%s278 + $0x58] sm:$0x3]
      %v321 = vld [vmem:[%s278 + $0x60] sm:$0xff]
      %v322 = vld [vmem:[%s278 + $0x68] sm:$0xff]
      %v323 = vld [vmem:[%s278 + $0x70] sm:$0x3]
      %v324 = vld [vmem:[%s278 + $0x78] sm:$0xff]
      %v325 = vld [vmem:[%s278 + $0x80] sm:$0xff]
      %v326 = vld [vmem:[%s278 + $0x88] sm:$0x3]
      %v327 = vld [vmem:[%s278 + $0x90] sm:$0xff]
      %v328 = vld [vmem:[%s278 + $0x98] sm:$0xff]
      %v329 = vld [vmem:[%s278 + $0xa0] sm:$0x3]
      %v330 = vld [vmem:[%s278 + $0xa8] sm:$0xff]
      %v331 = vld [vmem:[%s278 + $0xb0] sm:$0xff]
      %v332 = vld [vmem:[%s278 + $0xb8] sm:$0x3]
      %v333 = vld [vmem:[%s278 + $0xc0] sm:$0xff]
      %v334 = vld [vmem:[%s278 + $0xc8] sm:$0xff]
      %v335 = vld [vmem:[%s278 + $0xd0] sm:$0x3]
      %v336 = vld [vmem:[%s278 + $0xd8] sm:$0xff]
      %v337 = vld [vmem:[%s278 + $0xe0] sm:$0xff]
      %v338 = vld [vmem:[%s278 + $0xe8] sm:$0x3]
      %v339 = vld [vmem:[%s278 + $0xf0] sm:$0xff]
      %v340 = vld [vmem:[%s278 + $0xf8] sm:$0xff]
      %v341 = vld [vmem:[%s278 + $0x100] sm:$0x3]
      %v342 = vld [vmem:[%s278 + $0x108] sm:$0xff]
      %v343 = vld [vmem:[%s278 + $0x110] sm:$0xff]
      %v344 = vld [vmem:[%s278 + $0x118] sm:$0x3]
      %v345 = vld [vmem:[%s278 + $0x120] sm:$0xff]
      %v346 = vld [vmem:[%s278 + $0x128] sm:$0xff]
      %v347 = vld [vmem:[%s278 + $0x130] sm:$0x3]
      %v348 = vld [vmem:[%s278 + $0x138] sm:$0xff]
      %v349 = vld [vmem:[%s278 + $0x140] sm:$0xff]
      %v350 = vld [vmem:[%s278 + $0x148] sm:$0x3]
      %v351 = vld [vmem:[%s278 + $0x150] sm:$0xff]
      %v352 = vld [vmem:[%s278 + $0x158] sm:$0xff]
      %v353 = vld [vmem:[%s278 + $0x160] sm:$0x3]
      %v354 = vld [vmem:[%s278 + $0x168] sm:$0xff]
      %v355 = vld [vmem:[%s278 + $0x170] sm:$0xff]
      %v356 = vld [vmem:[%s278 + $0x178] sm:$0x3]
      %v357 = vld [vmem:[%s278 + $0x180] sm:$0xff]
      %v358 = vld [vmem:[%s278 + $0x188] sm:$0xff]
      %v359 = vld [vmem:[%s278 + $0x190] sm:$0x3]
      %v360 = vld [vmem:[%s278 + $0x198] sm:$0xff]
      %v361 = vld [vmem:[%s278 + $0x1a0] sm:$0xff]
      %v362 = vld [vmem:[%s278 + $0x1a8] sm:$0x3]
      %vm411 = vcmask 1046528
      %v412 = vrot.slane %v309, 1
      %v413 = vrot.slane %v310, 1
      %v414 = vsel %vm411, %v412, %v413
      %v415 = vrot.slane %v311, 1
      %v416 = vsel %vm411, %v413, %v415
      %v417 = vrot.slane %v312, 1
      %v418 = vrot.slane %v313, 1
      %v419 = vsel %vm411, %v417, %v418
      %v420 = vrot.slane %v314, 1
      %v421 = vsel %vm411, %v418, %v420
      %v422 = vrot.slane %v315, 1
      %v423 = vrot.slane %v316, 1
      %v424 = vsel %vm411, %v422, %v423
      %v425 = vrot.slane %v317, 1
      %v426 = vsel %vm411, %v423, %v425
      %v427 = vrot.slane %v318, 1
      %v428 = vrot.slane %v319, 1
      %v429 = vsel %vm411, %v427, %v428
      %v430 = vrot.slane %v320, 1
      %v431 = vsel %vm411, %v428, %v430
      %v432 = vrot.slane %v321, 1
      %v433 = vrot.slane %v322, 1
      %v434 = vsel %vm411, %v432, %v433
      %v435 = vrot.slane %v323, 1
      %v436 = vsel %vm411, %v433, %v435
      %v437 = vrot.slane %v324, 1
      %v438 = vrot.slane %v325, 1
      %v439 = vsel %vm411, %v437, %v438
      %v440 = vrot.slane %v326, 1
      %v441 = vsel %vm411, %v438, %v440
      %v442 = vrot.slane %v327, 1
      %v443 = vrot.slane %v328, 1
      %v444 = vsel %vm411, %v442, %v443
      %v445 = vrot.slane %v329, 1
      %v446 = vsel %vm411, %v443, %v445
      %v447 = vrot.slane %v330, 1
      %v448 = vrot.slane %v331, 1
      %v449 = vsel %vm411, %v447, %v448
      %v450 = vrot.slane %v332, 1
      %v451 = vsel %vm411, %v448, %v450
      %v452 = vrot.slane %v333, 1
      %v453 = vrot.slane %v334, 1
      %v454 = vsel %vm411, %v452, %v453
      %v455 = vrot.slane %v335, 1
      %v456 = vsel %vm411, %v453, %v455
      %v457 = vrot.slane %v336, 1
      %v458 = vrot.slane %v337, 1
      %v459 = vsel %vm411, %v457, %v458
      %v460 = vrot.slane %v338, 1
      %v461 = vsel %vm411, %v458, %v460
      %v462 = vrot.slane %v339, 1
      %v463 = vrot.slane %v340, 1
      %v464 = vsel %vm411, %v462, %v463
      %v465 = vrot.slane %v341, 1
      %v466 = vsel %vm411, %v463, %v465
      %v467 = vrot.slane %v342, 1
      %v468 = vrot.slane %v343, 1
      %v469 = vsel %vm411, %v467, %v468
      %v470 = vrot.slane %v344, 1
      %v471 = vsel %vm411, %v468, %v470
      %v472 = vrot.slane %v345, 1
      %v473 = vrot.slane %v346, 1
      %v474 = vsel %vm411, %v472, %v473
      %v475 = vrot.slane %v347, 1
      %v476 = vsel %vm411, %v473, %v475
      %v477 = vrot.slane %v348, 1
      %v478 = vrot.slane %v349, 1
      %v479 = vsel %vm411, %v477, %v478
      %v480 = vrot.slane %v350, 1
      %v481 = vsel %vm411, %v478, %v480
      %v482 = vrot.slane %v351, 1
      %v483 = vrot.slane %v352, 1
      %v484 = vsel %vm411, %v482, %v483
      %v485 = vrot.slane %v353, 1
      %v486 = vsel %vm411, %v483, %v485
      %v487 = vrot.slane %v354, 1
      %v488 = vrot.slane %v355, 1
      %v489 = vsel %vm411, %v487, %v488
      %v490 = vrot.slane %v356, 1
      %v491 = vsel %vm411, %v488, %v490
      %492 = vrot.lane.b32.xlu0 %v414, 4
      %v493 = vpop.permute.xlu0 %492
      %494 = vrot.lane.b32.xlu0 %v416, 4
      %v495 = vpop.permute.xlu0 %494
      %496 = vrot.lane.b32.xlu0 %v419, 4
      %v497 = vpop.permute.xlu0 %496
      %498 = vrot.lane.b32.xlu0 %v421, 4
      %v499 = vpop.permute.xlu0 %498
      %500 = vrot.lane.b32.xlu0 %v424, 4
      %v501 = vpop.permute.xlu0 %500
      %502 = vrot.lane.b32.xlu0 %v426, 4
      %v503 = vpop.permute.xlu0 %502
      %504 = vrot.lane.b32.xlu0 %v429, 4
      %v505 = vpop.permute.xlu0 %504
      %506 = vrot.lane.b32.xlu0 %v431, 4
      %v507 = vpop.permute.xlu0 %506
      %508 = vrot.lane.b32.xlu0 %v434, 4
      %v509 = vpop.permute.xlu0 %508
      %510 = vrot.lane.b32.xlu0 %v436, 4
      %v511 = vpop.permute.xlu0 %510
      %512 = vrot.lane.b32.xlu0 %v439, 4
      %v513 = vpop.permute.xlu0 %512
      %514 = vrot.lane.b32.xlu0 %v441, 4
      %v515 = vpop.permute.xlu0 %514
      %516 = vrot.lane.b32.xlu0 %v444, 4
      %v517 = vpop.permute.xlu0 %516
      %518 = vrot.lane.b32.xlu0 %v446, 4
      %v519 = vpop.permute.xlu0 %518
      %520 = vrot.lane.b32.xlu0 %v449, 4
      %v521 = vpop.permute.xlu0 %520
      %522 = vrot.lane.b32.xlu0 %v451, 4
      %v523 = vpop.permute.xlu0 %522
      %524 = vrot.lane.b32.xlu0 %v454, 4
      %v525 = vpop.permute.xlu0 %524
      %526 = vrot.lane.b32.xlu0 %v456, 4
      %v527 = vpop.permute.xlu0 %526
      %528 = vrot.lane.b32.xlu0 %v459, 4
      %v529 = vpop.permute.xlu0 %528
      %530 = vrot.lane.b32.xlu0 %v461, 4
      %v531 = vpop.permute.xlu0 %530
      %532 = vrot.lane.b32.xlu0 %v464, 4
      %v533 = vpop.permute.xlu0 %532
      %534 = vrot.lane.b32.xlu0 %v466, 4
      %v535 = vpop.permute.xlu0 %534
      %536 = vrot.lane.b32.xlu0 %v469, 4
      %v537 = vpop.permute.xlu0 %536
      %538 = vrot.lane.b32.xlu0 %v471, 4
      %v539 = vpop.permute.xlu0 %538
      %540 = vrot.lane.b32.xlu0 %v474, 4
      %v541 = vpop.permute.xlu0 %540
      %542 = vrot.lane.b32.xlu0 %v476, 4
      %v543 = vpop.permute.xlu0 %542
      %544 = vrot.lane.b32.xlu0 %v479, 4
      %v545 = vpop.permute.xlu0 %544
      %546 = vrot.lane.b32.xlu0 %v481, 4
      %v547 = vpop.permute.xlu0 %546
      %548 = vrot.lane.b32.xlu0 %v484, 4
      %v549 = vpop.permute.xlu0 %548
      %550 = vrot.lane.b32.xlu0 %v486, 4
      %v551 = vpop.permute.xlu0 %550
      %552 = vrot.lane.b32.xlu0 %v489, 4
      %v553 = vpop.permute.xlu0 %552
      %554 = vrot.lane.b32.xlu0 %v491, 4
      %v555 = vpop.permute.xlu0 %554
      %vm588 = vcmask 1045504
      %v589 = vrot.slane %v309, 2
      %v590 = vrot.slane %v310, 2
      %v591 = vsel %vm588, %v589, %v590
      %v592 = vrot.slane %v311, 2
      %v593 = vsel %vm588, %v590, %v592
      %v594 = vrot.slane %v312, 2
      %v595 = vrot.slane %v313, 2
      %v596 = vsel %vm588, %v594, %v595
      %v597 = vrot.slane %v314, 2
      %v598 = vsel %vm588, %v595, %v597
      %v599 = vrot.slane %v315, 2
      %v600 = vrot.slane %v316, 2
      %v601 = vsel %vm588, %v599, %v600
      %v602 = vrot.slane %v317, 2
      %v603 = vsel %vm588, %v600, %v602
      %v604 = vrot.slane %v318, 2
      %v605 = vrot.slane %v319, 2
      %v606 = vsel %vm588, %v604, %v605
      %v607 = vrot.slane %v320, 2
      %v608 = vsel %vm588, %v605, %v607
      %v609 = vrot.slane %v321, 2
      %v610 = vrot.slane %v322, 2
      %v611 = vsel %vm588, %v609, %v610
      %v612 = vrot.slane %v323, 2
      %v613 = vsel %vm588, %v610, %v612
      %v614 = vrot.slane %v324, 2
      %v615 = vrot.slane %v325, 2
      %v616 = vsel %vm588, %v614, %v615
      %v617 = vrot.slane %v326, 2
      %v618 = vsel %vm588, %v615, %v617
      %v619 = vrot.slane %v327, 2
      %v620 = vrot.slane %v328, 2
      %v621 = vsel %vm588, %v619, %v620
      %v622 = vrot.slane %v329, 2
      %v623 = vsel %vm588, %v620, %v622
      %v624 = vrot.slane %v330, 2
      %v625 = vrot.slane %v331, 2
      %v626 = vsel %vm588, %v624, %v625
      %v627 = vrot.slane %v332, 2
      %v628 = vsel %vm588, %v625, %v627
      %v629 = vrot.slane %v333, 2
      %v630 = vrot.slane %v334, 2
      %v631 = vsel %vm588, %v629, %v630
      %v632 = vrot.slane %v335, 2
      %v633 = vsel %vm588, %v630, %v632
      %v634 = vrot.slane %v336, 2
      %v635 = vrot.slane %v337, 2
      %v636 = vsel %vm588, %v634, %v635
      %v637 = vrot.slane %v338, 2
      %v638 = vsel %vm588, %v635, %v637
      %v639 = vrot.slane %v339, 2
      %v640 = vrot.slane %v340, 2
      %v641 = vsel %vm588, %v639, %v640
      %v642 = vrot.slane %v341, 2
      %v643 = vsel %vm588, %v640, %v642
      %v644 = vrot.slane %v342, 2
      %v645 = vrot.slane %v343, 2
      %v646 = vsel %vm588, %v644, %v645
      %v647 = vrot.slane %v344, 2
      %v648 = vsel %vm588, %v645, %v647
      %v649 = vrot.slane %v345, 2
      %v650 = vrot.slane %v346, 2
      %v651 = vsel %vm588, %v649, %v650
      %v652 = vrot.slane %v347, 2
      %v653 = vsel %vm588, %v650, %v652
      %v654 = vrot.slane %v348, 2
      %v655 = vrot.slane %v349, 2
      %v656 = vsel %vm588, %v654, %v655
      %v657 = vrot.slane %v350, 2
      %v658 = vsel %vm588, %v655, %v657
      %v659 = vrot.slane %v351, 2
      %v660 = vrot.slane %v352, 2
      %v661 = vsel %vm588, %v659, %v660
      %v662 = vrot.slane %v353, 2
      %v663 = vsel %vm588, %v660, %v662
      %v664 = vrot.slane %v354, 2
      %v665 = vrot.slane %v355, 2
      %v666 = vsel %vm588, %v664, %v665
      %v667 = vrot.slane %v356, 2
      %v668 = vsel %vm588, %v665, %v667
      %669 = vrot.lane.b32.xlu0 %v591, 8
      %v670 = vpop.permute.xlu0 %669
      %671 = vrot.lane.b32.xlu0 %v593, 8
      %v672 = vpop.permute.xlu0 %671
      %673 = vrot.lane.b32.xlu0 %v596, 8
      %v674 = vpop.permute.xlu0 %673
      %675 = vrot.lane.b32.xlu0 %v598, 8
      %v676 = vpop.permute.xlu0 %675
      %677 = vrot.lane.b32.xlu0 %v601, 8
      %v678 = vpop.permute.xlu0 %677
      %679 = vrot.lane.b32.xlu0 %v603, 8
      %v680 = vpop.permute.xlu0 %679
      %681 = vrot.lane.b32.xlu0 %v606, 8
      %v682 = vpop.permute.xlu0 %681
      %683 = vrot.lane.b32.xlu0 %v608, 8
      %v684 = vpop.permute.xlu0 %683
      %685 = vrot.lane.b32.xlu0 %v611, 8
      %v686 = vpop.permute.xlu0 %685
      %687 = vrot.lane.b32.xlu0 %v613, 8
      %v688 = vpop.permute.xlu0 %687
      %689 = vrot.lane.b32.xlu0 %v616, 8
      %v690 = vpop.permute.xlu0 %689
      %691 = vrot.lane.b32.xlu0 %v618, 8
      %v692 = vpop.permute.xlu0 %691
      %693 = vrot.lane.b32.xlu0 %v621, 8
      %v694 = vpop.permute.xlu0 %693
      %695 = vrot.lane.b32.xlu0 %v623, 8
      %v696 = vpop.permute.xlu0 %695
      %697 = vrot.lane.b32.xlu0 %v626, 8
      %v698 = vpop.permute.xlu0 %697
      %699 = vrot.lane.b32.xlu0 %v628, 8
      %v700 = vpop.permute.xlu0 %699
      %701 = vrot.lane.b32.xlu0 %v631, 8
      %v702 = vpop.permute.xlu0 %701
      %703 = vrot.lane.b32.xlu0 %v633, 8
      %v704 = vpop.permute.xlu0 %703
      %705 = vrot.lane.b32.xlu0 %v636, 8
      %v706 = vpop.permute.xlu0 %705
      %707 = vrot.lane.b32.xlu0 %v638, 8
      %v708 = vpop.permute.xlu0 %707
      %709 = vrot.lane.b32.xlu0 %v641, 8
      %v710 = vpop.permute.xlu0 %709
      %711 = vrot.lane.b32.xlu0 %v643, 8
      %v712 = vpop.permute.xlu0 %711
      %713 = vrot.lane.b32.xlu0 %v646, 8
      %v714 = vpop.permute.xlu0 %713
      %715 = vrot.lane.b32.xlu0 %v648, 8
      %v716 = vpop.permute.xlu0 %715
      %717 = vrot.lane.b32.xlu0 %v651, 8
      %v718 = vpop.permute.xlu0 %717
      %719 = vrot.lane.b32.xlu0 %v653, 8
      %v720 = vpop.permute.xlu0 %719
      %721 = vrot.lane.b32.xlu0 %v656, 8
      %v722 = vpop.permute.xlu0 %721
      %723 = vrot.lane.b32.xlu0 %v658, 8
      %v724 = vpop.permute.xlu0 %723
      %725 = vrot.lane.b32.xlu0 %v661, 8
      %v726 = vpop.permute.xlu0 %725
      %727 = vrot.lane.b32.xlu0 %v663, 8
      %v728 = vpop.permute.xlu0 %727
      %729 = vrot.lane.b32.xlu0 %v666, 8
      %v730 = vpop.permute.xlu0 %729
      %731 = vrot.lane.b32.xlu0 %v668, 8
      %v732 = vpop.permute.xlu0 %731
      %767 = vrot.lane.b32.xlu0 %v312, 12
      %v768 = vpop.permute.xlu0 %767
      %769 = vrot.lane.b32.xlu0 %v313, 12
      %v770 = vpop.permute.xlu0 %769
      %771 = vrot.lane.b32.xlu0 %v315, 12
      %v772 = vpop.permute.xlu0 %771
      %773 = vrot.lane.b32.xlu0 %v316, 12
      %v774 = vpop.permute.xlu0 %773
      %775 = vrot.lane.b32.xlu0 %v318, 12
      %v776 = vpop.permute.xlu0 %775
      %777 = vrot.lane.b32.xlu0 %v319, 12
      %v778 = vpop.permute.xlu0 %777
      %779 = vrot.lane.b32.xlu0 %v321, 12
      %v780 = vpop.permute.xlu0 %779
      %781 = vrot.lane.b32.xlu0 %v322, 12
      %v782 = vpop.permute.xlu0 %781
      %783 = vrot.lane.b32.xlu0 %v324, 12
      %v784 = vpop.permute.xlu0 %783
      %785 = vrot.lane.b32.xlu0 %v325, 12
      %v786 = vpop.permute.xlu0 %785
      %787 = vrot.lane.b32.xlu0 %v327, 12
      %v788 = vpop.permute.xlu0 %787
      %789 = vrot.lane.b32.xlu0 %v328, 12
      %v790 = vpop.permute.xlu0 %789
      %791 = vrot.lane.b32.xlu0 %v330, 12
      %v792 = vpop.permute.xlu0 %791
      %793 = vrot.lane.b32.xlu0 %v331, 12
      %v794 = vpop.permute.xlu0 %793
      %795 = vrot.lane.b32.xlu0 %v333, 12
      %v796 = vpop.permute.xlu0 %795
      %797 = vrot.lane.b32.xlu0 %v334, 12
      %v798 = vpop.permute.xlu0 %797
      %799 = vrot.lane.b32.xlu0 %v336, 12
      %v800 = vpop.permute.xlu0 %799
      %801 = vrot.lane.b32.xlu0 %v337, 12
      %v802 = vpop.permute.xlu0 %801
      %803 = vrot.lane.b32.xlu0 %v339, 12
      %v804 = vpop.permute.xlu0 %803
      %805 = vrot.lane.b32.xlu0 %v340, 12
      %v806 = vpop.permute.xlu0 %805
      %807 = vrot.lane.b32.xlu0 %v342, 12
      %v808 = vpop.permute.xlu0 %807
      %809 = vrot.lane.b32.xlu0 %v343, 12
      %v810 = vpop.permute.xlu0 %809
      %811 = vrot.lane.b32.xlu0 %v345, 12
      %v812 = vpop.permute.xlu0 %811
      %813 = vrot.lane.b32.xlu0 %v346, 12
      %v814 = vpop.permute.xlu0 %813
      %815 = vrot.lane.b32.xlu0 %v348, 12
      %v816 = vpop.permute.xlu0 %815
      %817 = vrot.lane.b32.xlu0 %v349, 12
      %v818 = vpop.permute.xlu0 %817
      %819 = vrot.lane.b32.xlu0 %v351, 12
      %v820 = vpop.permute.xlu0 %819
      %821 = vrot.lane.b32.xlu0 %v352, 12
      %v822 = vpop.permute.xlu0 %821
      %823 = vrot.lane.b32.xlu0 %v354, 12
      %v824 = vpop.permute.xlu0 %823
      %825 = vrot.lane.b32.xlu0 %v355, 12
      %v826 = vpop.permute.xlu0 %825
      %827 = vrot.lane.b32.xlu0 %v357, 12
      %v828 = vpop.permute.xlu0 %827
      %829 = vrot.lane.b32.xlu0 %v358, 12
      %v830 = vpop.permute.xlu0 %829
      %v864 = vrot.slane %v357, 1
      %v865 = vrot.slane %v358, 1
      %v866 = vsel %vm411, %v864, %v865
      %v867 = vrot.slane %v359, 1
      %v868 = vsel %vm411, %v865, %v867
      %869 = vrot.lane.b32.xlu0 %v419, 16
      %v870 = vpop.permute.xlu0 %869
      %871 = vrot.lane.b32.xlu0 %v421, 16
      %v872 = vpop.permute.xlu0 %871
      %873 = vrot.lane.b32.xlu0 %v424, 16
      %v874 = vpop.permute.xlu0 %873
      %875 = vrot.lane.b32.xlu0 %v426, 16
      %v876 = vpop.permute.xlu0 %875
      %877 = vrot.lane.b32.xlu0 %v429, 16
      %v878 = vpop.permute.xlu0 %877
      %879 = vrot.lane.b32.xlu0 %v431, 16
      %v880 = vpop.permute.xlu0 %879
      %881 = vrot.lane.b32.xlu0 %v434, 16
      %v882 = vpop.permute.xlu0 %881
      %883 = vrot.lane.b32.xlu0 %v436, 16
      %v884 = vpop.permute.xlu0 %883
      %885 = vrot.lane.b32.xlu0 %v439, 16
      %v886 = vpop.permute.xlu0 %885
      %887 = vrot.lane.b32.xlu0 %v441, 16
      %v888 = vpop.permute.xlu0 %887
      %889 = vrot.lane.b32.xlu0 %v444, 16
      %v890 = vpop.permute.xlu0 %889
      %891 = vrot.lane.b32.xlu0 %v446, 16
      %v892 = vpop.permute.xlu0 %891
      %893 = vrot.lane.b32.xlu0 %v449, 16
      %v894 = vpop.permute.xlu0 %893
      %895 = vrot.lane.b32.xlu0 %v451, 16
      %v896 = vpop.permute.xlu0 %895
      %897 = vrot.lane.b32.xlu0 %v454, 16
      %v898 = vpop.permute.xlu0 %897
      %899 = vrot.lane.b32.xlu0 %v456, 16
      %v900 = vpop.permute.xlu0 %899
      %901 = vrot.lane.b32.xlu0 %v459, 16
      %v902 = vpop.permute.xlu0 %901
      %903 = vrot.lane.b32.xlu0 %v461, 16
      %v904 = vpop.permute.xlu0 %903
      %905 = vrot.lane.b32.xlu0 %v464, 16
      %v906 = vpop.permute.xlu0 %905
      %907 = vrot.lane.b32.xlu0 %v466, 16
      %v908 = vpop.permute.xlu0 %907
      %909 = vrot.lane.b32.xlu0 %v469, 16
      %v910 = vpop.permute.xlu0 %909
      %911 = vrot.lane.b32.xlu0 %v471, 16
      %v912 = vpop.permute.xlu0 %911
      %913 = vrot.lane.b32.xlu0 %v474, 16
      %v914 = vpop.permute.xlu0 %913
      %915 = vrot.lane.b32.xlu0 %v476, 16
      %v916 = vpop.permute.xlu0 %915
      %917 = vrot.lane.b32.xlu0 %v479, 16
      %v918 = vpop.permute.xlu0 %917
      %919 = vrot.lane.b32.xlu0 %v481, 16
      %v920 = vpop.permute.xlu0 %919
      %921 = vrot.lane.b32.xlu0 %v484, 16
      %v922 = vpop.permute.xlu0 %921
      %923 = vrot.lane.b32.xlu0 %v486, 16
      %v924 = vpop.permute.xlu0 %923
      %925 = vrot.lane.b32.xlu0 %v489, 16
      %v926 = vpop.permute.xlu0 %925
      %927 = vrot.lane.b32.xlu0 %v491, 16
      %v928 = vpop.permute.xlu0 %927
      %929 = vrot.lane.b32.xlu0 %v866, 16
      %v930 = vpop.permute.xlu0 %929
      %931 = vrot.lane.b32.xlu0 %v868, 16
      %v932 = vpop.permute.xlu0 %931
      %v965 = vrot.slane %v357, 2
      %v966 = vrot.slane %v358, 2
      %v967 = vsel %vm588, %v965, %v966
      %v968 = vrot.slane %v359, 2
      %v969 = vsel %vm588, %v966, %v968
      %970 = vrot.lane.b32.xlu0 %v596, 20
      %v971 = vpop.permute.xlu0 %970
      %972 = vrot.lane.b32.xlu0 %v598, 20
      %v973 = vpop.permute.xlu0 %972
      %974 = vrot.lane.b32.xlu0 %v601, 20
      %v975 = vpop.permute.xlu0 %974
      %976 = vrot.lane.b32.xlu0 %v603, 20
      %v977 = vpop.permute.xlu0 %976
      %978 = vrot.lane.b32.xlu0 %v606, 20
      %v979 = vpop.permute.xlu0 %978
      %980 = vrot.lane.b32.xlu0 %v608, 20
      %v981 = vpop.permute.xlu0 %980
      %982 = vrot.lane.b32.xlu0 %v611, 20
      %v983 = vpop.permute.xlu0 %982
      %984 = vrot.lane.b32.xlu0 %v613, 20
      %v985 = vpop.permute.xlu0 %984
      %986 = vrot.lane.b32.xlu0 %v616, 20
      %v987 = vpop.permute.xlu0 %986
      %988 = vrot.lane.b32.xlu0 %v618, 20
      %v989 = vpop.permute.xlu0 %988
      %990 = vrot.lane.b32.xlu0 %v621, 20
      %v991 = vpop.permute.xlu0 %990
      %992 = vrot.lane.b32.xlu0 %v623, 20
      %v993 = vpop.permute.xlu0 %992
      %994 = vrot.lane.b32.xlu0 %v626, 20
      %v995 = vpop.permute.xlu0 %994
      %996 = vrot.lane.b32.xlu0 %v628, 20
      %v997 = vpop.permute.xlu0 %996
      %998 = vrot.lane.b32.xlu0 %v631, 20
      %v999 = vpop.permute.xlu0 %998
      %1000 = vrot.lane.b32.xlu0 %v633, 20
      %v1001 = vpop.permute.xlu0 %1000
      %1002 = vrot.lane.b32.xlu0 %v636, 20
      %v1003 = vpop.permute.xlu0 %1002
      %1004 = vrot.lane.b32.xlu0 %v638, 20
      %v1005 = vpop.permute.xlu0 %1004
      %1006 = vrot.lane.b32.xlu0 %v641, 20
      %v1007 = vpop.permute.xlu0 %1006
      %1008 = vrot.lane.b32.xlu0 %v643, 20
      %v1009 = vpop.permute.xlu0 %1008
      %1010 = vrot.lane.b32.xlu0 %v646, 20
      %v1011 = vpop.permute.xlu0 %1010
      %1012 = vrot.lane.b32.xlu0 %v648, 20
      %v1013 = vpop.permute.xlu0 %1012
      %1014 = vrot.lane.b32.xlu0 %v651, 20
      %v1015 = vpop.permute.xlu0 %1014
      %1016 = vrot.lane.b32.xlu0 %v653, 20
      %v1017 = vpop.permute.xlu0 %1016
      %1018 = vrot.lane.b32.xlu0 %v656, 20
      %v1019 = vpop.permute.xlu0 %1018
      %1020 = vrot.lane.b32.xlu0 %v658, 20
      %v1021 = vpop.permute.xlu0 %1020
      %1022 = vrot.lane.b32.xlu0 %v661, 20
      %v1023 = vpop.permute.xlu0 %1022
      %1024 = vrot.lane.b32.xlu0 %v663, 20
      %v1025 = vpop.permute.xlu0 %1024
      %1026 = vrot.lane.b32.xlu0 %v666, 20
      %v1027 = vpop.permute.xlu0 %1026
      %1028 = vrot.lane.b32.xlu0 %v668, 20
      %v1029 = vpop.permute.xlu0 %1028
      %1030 = vrot.lane.b32.xlu0 %v967, 20
      %v1031 = vpop.permute.xlu0 %1030
      %1032 = vrot.lane.b32.xlu0 %v969, 20
      %v1033 = vpop.permute.xlu0 %1032
      %1068 = vrot.lane.b32.xlu0 %v315, 24
      %v1069 = vpop.permute.xlu0 %1068
      %1070 = vrot.lane.b32.xlu0 %v316, 24
      %v1071 = vpop.permute.xlu0 %1070
      %1072 = vrot.lane.b32.xlu0 %v318, 24
      %v1073 = vpop.permute.xlu0 %1072
      %1074 = vrot.lane.b32.xlu0 %v319, 24
      %v1075 = vpop.permute.xlu0 %1074
      %1076 = vrot.lane.b32.xlu0 %v321, 24
      %v1077 = vpop.permute.xlu0 %1076
      %1078 = vrot.lane.b32.xlu0 %v322, 24
      %v1079 = vpop.permute.xlu0 %1078
      %1080 = vrot.lane.b32.xlu0 %v324, 24
      %v1081 = vpop.permute.xlu0 %1080
      %1082 = vrot.lane.b32.xlu0 %v325, 24
      %v1083 = vpop.permute.xlu0 %1082
      %1084 = vrot.lane.b32.xlu0 %v327, 24
      %v1085 = vpop.permute.xlu0 %1084
      %1086 = vrot.lane.b32.xlu0 %v328, 24
      %v1087 = vpop.permute.xlu0 %1086
      %1088 = vrot.lane.b32.xlu0 %v330, 24
      %v1089 = vpop.permute.xlu0 %1088
      %1090 = vrot.lane.b32.xlu0 %v331, 24
      %v1091 = vpop.permute.xlu0 %1090
      %1092 = vrot.lane.b32.xlu0 %v333, 24
      %v1093 = vpop.permute.xlu0 %1092
      %1094 = vrot.lane.b32.xlu0 %v334, 24
      %v1095 = vpop.permute.xlu0 %1094
      %1096 = vrot.lane.b32.xlu0 %v336, 24
      %v1097 = vpop.permute.xlu0 %1096
      %1098 = vrot.lane.b32.xlu0 %v337, 24
      %v1099 = vpop.permute.xlu0 %1098
      %1100 = vrot.lane.b32.xlu0 %v339, 24
      %v1101 = vpop.permute.xlu0 %1100
      %1102 = vrot.lane.b32.xlu0 %v340, 24
      %v1103 = vpop.permute.xlu0 %1102
      %1104 = vrot.lane.b32.xlu0 %v342, 24
      %v1105 = vpop.permute.xlu0 %1104
      %1106 = vrot.lane.b32.xlu0 %v343, 24
      %v1107 = vpop.permute.xlu0 %1106
      %1108 = vrot.lane.b32.xlu0 %v345, 24
      %v1109 = vpop.permute.xlu0 %1108
      %1110 = vrot.lane.b32.xlu0 %v346, 24
      %v1111 = vpop.permute.xlu0 %1110
      %1112 = vrot.lane.b32.xlu0 %v348, 24
      %v1113 = vpop.permute.xlu0 %1112
      %1114 = vrot.lane.b32.xlu0 %v349, 24
      %v1115 = vpop.permute.xlu0 %1114
      %1116 = vrot.lane.b32.xlu0 %v351, 24
      %v1117 = vpop.permute.xlu0 %1116
      %1118 = vrot.lane.b32.xlu0 %v352, 24
      %v1119 = vpop.permute.xlu0 %1118
      %1120 = vrot.lane.b32.xlu0 %v354, 24
      %v1121 = vpop.permute.xlu0 %1120
      %1122 = vrot.lane.b32.xlu0 %v355, 24
      %v1123 = vpop.permute.xlu0 %1122
      %1124 = vrot.lane.b32.xlu0 %v357, 24
      %v1125 = vpop.permute.xlu0 %1124
      %1126 = vrot.lane.b32.xlu0 %v358, 24
      %v1127 = vpop.permute.xlu0 %1126
      %1128 = vrot.lane.b32.xlu0 %v360, 24
      %v1129 = vpop.permute.xlu0 %1128
      %1130 = vrot.lane.b32.xlu0 %v361, 24
      %v1131 = vpop.permute.xlu0 %1130
      %v1165 = vrot.slane %v360, 1
      %v1166 = vrot.slane %v361, 1
      %v1167 = vsel %vm411, %v1165, %v1166
      %v1168 = vrot.slane %v362, 1
      %v1169 = vsel %vm411, %v1166, %v1168
      %1170 = vrot.lane.b32.xlu0 %v424, 28
      %v1171 = vpop.permute.xlu0 %1170
      %1172 = vrot.lane.b32.xlu0 %v426, 28
      %v1173 = vpop.permute.xlu0 %1172
      %1174 = vrot.lane.b32.xlu0 %v429, 28
      %v1175 = vpop.permute.xlu0 %1174
      %1176 = vrot.lane.b32.xlu0 %v431, 28
      %v1177 = vpop.permute.xlu0 %1176
      %1178 = vrot.lane.b32.xlu0 %v434, 28
      %v1179 = vpop.permute.xlu0 %1178
      %1180 = vrot.lane.b32.xlu0 %v436, 28
      %v1181 = vpop.permute.xlu0 %1180
      %1182 = vrot.lane.b32.xlu0 %v439, 28
      %v1183 = vpop.permute.xlu0 %1182
      %1184 = vrot.lane.b32.xlu0 %v441, 28
      %v1185 = vpop.permute.xlu0 %1184
      %1186 = vrot.lane.b32.xlu0 %v444, 28
      %v1187 = vpop.permute.xlu0 %1186
      %1188 = vrot.lane.b32.xlu0 %v446, 28
      %v1189 = vpop.permute.xlu0 %1188
      %1190 = vrot.lane.b32.xlu0 %v449, 28
      %v1191 = vpop.permute.xlu0 %1190
      %1192 = vrot.lane.b32.xlu0 %v451, 28
      %v1193 = vpop.permute.xlu0 %1192
      %1194 = vrot.lane.b32.xlu0 %v454, 28
      %v1195 = vpop.permute.xlu0 %1194
      %1196 = vrot.lane.b32.xlu0 %v456, 28
      %v1197 = vpop.permute.xlu0 %1196
      %1198 = vrot.lane.b32.xlu0 %v459, 28
      %v1199 = vpop.permute.xlu0 %1198
      %1200 = vrot.lane.b32.xlu0 %v461, 28
      %v1201 = vpop.permute.xlu0 %1200
      %1202 = vrot.lane.b32.xlu0 %v464, 28
      %v1203 = vpop.permute.xlu0 %1202
      %1204 = vrot.lane.b32.xlu0 %v466, 28
      %v1205 = vpop.permute.xlu0 %1204
      %1206 = vrot.lane.b32.xlu0 %v469, 28
      %v1207 = vpop.permute.xlu0 %1206
      %1208 = vrot.lane.b32.xlu0 %v471, 28
      %v1209 = vpop.permute.xlu0 %1208
      %1210 = vrot.lane.b32.xlu0 %v474, 28
      %v1211 = vpop.permute.xlu0 %1210
      %1212 = vrot.lane.b32.xlu0 %v476, 28
      %v1213 = vpop.permute.xlu0 %1212
      %1214 = vrot.lane.b32.xlu0 %v479, 28
      %v1215 = vpop.permute.xlu0 %1214
      %1216 = vrot.lane.b32.xlu0 %v481, 28
      %v1217 = vpop.permute.xlu0 %1216
      %1218 = vrot.lane.b32.xlu0 %v484, 28
      %v1219 = vpop.permute.xlu0 %1218
      %1220 = vrot.lane.b32.xlu0 %v486, 28
      %v1221 = vpop.permute.xlu0 %1220
      %1222 = vrot.lane.b32.xlu0 %v489, 28
      %v1223 = vpop.permute.xlu0 %1222
      %1224 = vrot.lane.b32.xlu0 %v491, 28
      %v1225 = vpop.permute.xlu0 %1224
      %1226 = vrot.lane.b32.xlu0 %v866, 28
      %v1227 = vpop.permute.xlu0 %1226
      %1228 = vrot.lane.b32.xlu0 %v868, 28
      %v1229 = vpop.permute.xlu0 %1228
      %1230 = vrot.lane.b32.xlu0 %v1167, 28
      %v1231 = vpop.permute.xlu0 %1230
      %1232 = vrot.lane.b32.xlu0 %v1169, 28
      %v1233 = vpop.permute.xlu0 %1232
      %v1266 = vrot.slane %v360, 2
      %v1267 = vrot.slane %v361, 2
      %v1268 = vsel %vm588, %v1266, %v1267
      %v1269 = vrot.slane %v362, 2
      %v1270 = vsel %vm588, %v1267, %v1269
      %1271 = vrot.lane.b32.xlu0 %v601, 32
      %v1272 = vpop.permute.xlu0 %1271
      %1273 = vrot.lane.b32.xlu0 %v603, 32
      %v1274 = vpop.permute.xlu0 %1273
      %1275 = vrot.lane.b32.xlu0 %v606, 32
      %v1276 = vpop.permute.xlu0 %1275
      %1277 = vrot.lane.b32.xlu0 %v608, 32
      %v1278 = vpop.permute.xlu0 %1277
      %1279 = vrot.lane.b32.xlu0 %v611, 32
      %v1280 = vpop.permute.xlu0 %1279
      %1281 = vrot.lane.b32.xlu0 %v613, 32
      %v1282 = vpop.permute.xlu0 %1281
      %1283 = vrot.lane.b32.xlu0 %v616, 32
      %v1284 = vpop.permute.xlu0 %1283
      %1285 = vrot.lane.b32.xlu0 %v618, 32
      %v1286 = vpop.permute.xlu0 %1285
      %1287 = vrot.lane.b32.xlu0 %v621, 32
      %v1288 = vpop.permute.xlu0 %1287
      %1289 = vrot.lane.b32.xlu0 %v623, 32
      %v1290 = vpop.permute.xlu0 %1289
      %1291 = vrot.lane.b32.xlu0 %v626, 32
      %v1292 = vpop.permute.xlu0 %1291
      %1293 = vrot.lane.b32.xlu0 %v628, 32
      %v1294 = vpop.permute.xlu0 %1293
      %1295 = vrot.lane.b32.xlu0 %v631, 32
      %v1296 = vpop.permute.xlu0 %1295
      %1297 = vrot.lane.b32.xlu0 %v633, 32
      %v1298 = vpop.permute.xlu0 %1297
      %1299 = vrot.lane.b32.xlu0 %v636, 32
      %v1300 = vpop.permute.xlu0 %1299
      %1301 = vrot.lane.b32.xlu0 %v638, 32
      %v1302 = vpop.permute.xlu0 %1301
      %1303 = vrot.lane.b32.xlu0 %v641, 32
      %v1304 = vpop.permute.xlu0 %1303
      %1305 = vrot.lane.b32.xlu0 %v643, 32
      %v1306 = vpop.permute.xlu0 %1305
      %1307 = vrot.lane.b32.xlu0 %v646, 32
      %v1308 = vpop.permute.xlu0 %1307
      %1309 = vrot.lane.b32.xlu0 %v648, 32
      %v1310 = vpop.permute.xlu0 %1309
      %1311 = vrot.lane.b32.xlu0 %v651, 32
      %v1312 = vpop.permute.xlu0 %1311
      %1313 = vrot.lane.b32.xlu0 %v653, 32
      %v1314 = vpop.permute.xlu0 %1313
      %1315 = vrot.lane.b32.xlu0 %v656, 32
      %v1316 = vpop.permute.xlu0 %1315
      %1317 = vrot.lane.b32.xlu0 %v658, 32
      %v1318 = vpop.permute.xlu0 %1317
      %1319 = vrot.lane.b32.xlu0 %v661, 32
      %v1320 = vpop.permute.xlu0 %1319
      %1321 = vrot.lane.b32.xlu0 %v663, 32
      %v1322 = vpop.permute.xlu0 %1321
      %1323 = vrot.lane.b32.xlu0 %v666, 32
      %v1324 = vpop.permute.xlu0 %1323
      %1325 = vrot.lane.b32.xlu0 %v668, 32
      %v1326 = vpop.permute.xlu0 %1325
      %1327 = vrot.lane.b32.xlu0 %v967, 32
      %v1328 = vpop.permute.xlu0 %1327
      %1329 = vrot.lane.b32.xlu0 %v969, 32
      %v1330 = vpop.permute.xlu0 %1329
      %1331 = vrot.lane.b32.xlu0 %v1268, 32
      %v1332 = vpop.permute.xlu0 %1331
      %1333 = vrot.lane.b32.xlu0 %v1270, 32
      %v1334 = vpop.permute.xlu0 %1333
      %vm1367 = vcmask 31744
      %v1368 = vsel %vm1367, %v309, %v493
      %v1369 = vsel %vm1367, %v310, %v495
      %v1370 = vsel %vm1367, %v312, %v497
      %v1371 = vsel %vm1367, %v313, %v499
      %v1372 = vsel %vm1367, %v315, %v501
      %v1373 = vsel %vm1367, %v316, %v503
      %v1374 = vsel %vm1367, %v318, %v505
      %v1375 = vsel %vm1367, %v319, %v507
      %v1376 = vsel %vm1367, %v321, %v509
      %v1377 = vsel %vm1367, %v322, %v511
      %v1378 = vsel %vm1367, %v324, %v513
      %v1379 = vsel %vm1367, %v325, %v515
      %v1380 = vsel %vm1367, %v327, %v517
      %v1381 = vsel %vm1367, %v328, %v519
      %v1382 = vsel %vm1367, %v330, %v521
      %v1383 = vsel %vm1367, %v331, %v523
      %v1384 = vsel %vm1367, %v333, %v525
      %v1385 = vsel %vm1367, %v334, %v527
      %v1386 = vsel %vm1367, %v336, %v529
      %v1387 = vsel %vm1367, %v337, %v531
      %v1388 = vsel %vm1367, %v339, %v533
      %v1389 = vsel %vm1367, %v340, %v535
      %v1390 = vsel %vm1367, %v342, %v537
      %v1391 = vsel %vm1367, %v343, %v539
      %v1392 = vsel %vm1367, %v345, %v541
      %v1393 = vsel %vm1367, %v346, %v543
      %v1394 = vsel %vm1367, %v348, %v545
      %v1395 = vsel %vm1367, %v349, %v547
      %v1396 = vsel %vm1367, %v351, %v549
      %v1397 = vsel %vm1367, %v352, %v551
      %v1398 = vsel %vm1367, %v354, %v553
      %v1399 = vsel %vm1367, %v355, %v555
      %vm1400 = vcmask 64512
      %v1401 = vsel %vm1400, %v1368, %v670
      %v1402 = vsel %vm1400, %v1369, %v672
      %v1403 = vsel %vm1400, %v1370, %v674
      %v1404 = vsel %vm1400, %v1371, %v676
      %v1405 = vsel %vm1400, %v1372, %v678
      %v1406 = vsel %vm1400, %v1373, %v680
      %v1407 = vsel %vm1400, %v1374, %v682
      %v1408 = vsel %vm1400, %v1375, %v684
      %v1409 = vsel %vm1400, %v1376, %v686
      %v1410 = vsel %vm1400, %v1377, %v688
      %v1411 = vsel %vm1400, %v1378, %v690
      %v1412 = vsel %vm1400, %v1379, %v692
      %v1413 = vsel %vm1400, %v1380, %v694
      %v1414 = vsel %vm1400, %v1381, %v696
      %v1415 = vsel %vm1400, %v1382, %v698
      %v1416 = vsel %vm1400, %v1383, %v700
      %v1417 = vsel %vm1400, %v1384, %v702
      %v1418 = vsel %vm1400, %v1385, %v704
      %v1419 = vsel %vm1400, %v1386, %v706
      %v1420 = vsel %vm1400, %v1387, %v708
      %v1421 = vsel %vm1400, %v1388, %v710
      %v1422 = vsel %vm1400, %v1389, %v712
      %v1423 = vsel %vm1400, %v1390, %v714
      %v1424 = vsel %vm1400, %v1391, %v716
      %v1425 = vsel %vm1400, %v1392, %v718
      %v1426 = vsel %vm1400, %v1393, %v720
      %v1427 = vsel %vm1400, %v1394, %v722
      %v1428 = vsel %vm1400, %v1395, %v724
      %v1429 = vsel %vm1400, %v1396, %v726
      %v1430 = vsel %vm1400, %v1397, %v728
      %v1431 = vsel %vm1400, %v1398, %v730
      %v1432 = vsel %vm1400, %v1399, %v732
      %vm1433 = vcmask 97280
      %v1434 = vsel %vm1433, %v1401, %v768
      %v1435 = vsel %vm1433, %v1402, %v770
      %v1436 = vsel %vm1433, %v1403, %v772
      %v1437 = vsel %vm1433, %v1404, %v774
      %v1438 = vsel %vm1433, %v1405, %v776
      %v1439 = vsel %vm1433, %v1406, %v778
      %v1440 = vsel %vm1433, %v1407, %v780
      %v1441 = vsel %vm1433, %v1408, %v782
      %v1442 = vsel %vm1433, %v1409, %v784
      %v1443 = vsel %vm1433, %v1410, %v786
      %v1444 = vsel %vm1433, %v1411, %v788
      %v1445 = vsel %vm1433, %v1412, %v790
      %v1446 = vsel %vm1433, %v1413, %v792
      %v1447 = vsel %vm1433, %v1414, %v794
      %v1448 = vsel %vm1433, %v1415, %v796
      %v1449 = vsel %vm1433, %v1416, %v798
      %v1450 = vsel %vm1433, %v1417, %v800
      %v1451 = vsel %vm1433, %v1418, %v802
      %v1452 = vsel %vm1433, %v1419, %v804
      %v1453 = vsel %vm1433, %v1420, %v806
      %v1454 = vsel %vm1433, %v1421, %v808
      %v1455 = vsel %vm1433, %v1422, %v810
      %v1456 = vsel %vm1433, %v1423, %v812
      %v1457 = vsel %vm1433, %v1424, %v814
      %v1458 = vsel %vm1433, %v1425, %v816
      %v1459 = vsel %vm1433, %v1426, %v818
      %v1460 = vsel %vm1433, %v1427, %v820
      %v1461 = vsel %vm1433, %v1428, %v822
      %v1462 = vsel %vm1433, %v1429, %v824
      %v1463 = vsel %vm1433, %v1430, %v826
      %v1464 = vsel %vm1433, %v1431, %v828
      %v1465 = vsel %vm1433, %v1432, %v830
      %vm1466 = vcmask 130048
      %v1467 = vsel %vm1466, %v1434, %v870
      %v1468 = vsel %vm1466, %v1435, %v872
      %v1469 = vsel %vm1466, %v1436, %v874
      %v1470 = vsel %vm1466, %v1437, %v876
      %v1471 = vsel %vm1466, %v1438, %v878
      %v1472 = vsel %vm1466, %v1439, %v880
      %v1473 = vsel %vm1466, %v1440, %v882
      %v1474 = vsel %vm1466, %v1441, %v884
      %v1475 = vsel %vm1466, %v1442, %v886
      %v1476 = vsel %vm1466, %v1443, %v888
      %v1477 = vsel %vm1466, %v1444, %v890
      %v1478 = vsel %vm1466, %v1445, %v892
      %v1479 = vsel %vm1466, %v1446, %v894
      %v1480 = vsel %vm1466, %v1447, %v896
      %v1481 = vsel %vm1466, %v1448, %v898
      %v1482 = vsel %vm1466, %v1449, %v900
      %v1483 = vsel %vm1466, %v1450, %v902
      %v1484 = vsel %vm1466, %v1451, %v904
      %v1485 = vsel %vm1466, %v1452, %v906
      %v1486 = vsel %vm1466, %v1453, %v908
      %v1487 = vsel %vm1466, %v1454, %v910
      %v1488 = vsel %vm1466, %v1455, %v912
      %v1489 = vsel %vm1466, %v1456, %v914
      %v1490 = vsel %vm1466, %v1457, %v916
      %v1491 = vsel %vm1466, %v1458, %v918
      %v1492 = vsel %vm1466, %v1459, %v920
      %v1493 = vsel %vm1466, %v1460, %v922
      %v1494 = vsel %vm1466, %v1461, %v924
      %v1495 = vsel %vm1466, %v1462, %v926
      %v1496 = vsel %vm1466, %v1463, %v928
      %v1497 = vsel %vm1466, %v1464, %v930
      %v1498 = vsel %vm1466, %v1465, %v932
      %vm1499 = vcmask 162816
      %v1500 = vsel %vm1499, %v1467, %v971
      %v1501 = vsel %vm1499, %v1468, %v973
      %v1502 = vsel %vm1499, %v1469, %v975
      %v1503 = vsel %vm1499, %v1470, %v977
      %v1504 = vsel %vm1499, %v1471, %v979
      %v1505 = vsel %vm1499, %v1472, %v981
      %v1506 = vsel %vm1499, %v1473, %v983
      %v1507 = vsel %vm1499, %v1474, %v985
      %v1508 = vsel %vm1499, %v1475, %v987
      %v1509 = vsel %vm1499, %v1476, %v989
      %v1510 = vsel %vm1499, %v1477, %v991
      %v1511 = vsel %vm1499, %v1478, %v993
      %v1512 = vsel %vm1499, %v1479, %v995
      %v1513 = vsel %vm1499, %v1480, %v997
      %v1514 = vsel %vm1499, %v1481, %v999
      %v1515 = vsel %vm1499, %v1482, %v1001
      %v1516 = vsel %vm1499, %v1483, %v1003
      %v1517 = vsel %vm1499, %v1484, %v1005
      %v1518 = vsel %vm1499, %v1485, %v1007
      %v1519 = vsel %vm1499, %v1486, %v1009
      %v1520 = vsel %vm1499, %v1487, %v1011
      %v1521 = vsel %vm1499, %v1488, %v1013
      %v1522 = vsel %vm1499, %v1489, %v1015
      %v1523 = vsel %vm1499, %v1490, %v1017
      %v1524 = vsel %vm1499, %v1491, %v1019
      %v1525 = vsel %vm1499, %v1492, %v1021
      %v1526 = vsel %vm1499, %v1493, %v1023
      %v1527 = vsel %vm1499, %v1494, %v1025
      %v1528 = vsel %vm1499, %v1495, %v1027
      %v1529 = vsel %vm1499, %v1496, %v1029
      %v1530 = vsel %vm1499, %v1497, %v1031
      %v1531 = vsel %vm1499, %v1498, %v1033
      %vm1532 = vcmask 195584
      %v1533 = vsel %vm1532, %v1500, %v1069
      %v1534 = vsel %vm1532, %v1501, %v1071
      %v1535 = vsel %vm1532, %v1502, %v1073
      %v1536 = vsel %vm1532, %v1503, %v1075
      %v1537 = vsel %vm1532, %v1504, %v1077
      %v1538 = vsel %vm1532, %v1505, %v1079
      %v1539 = vsel %vm1532, %v1506, %v1081
      %v1540 = vsel %vm1532, %v1507, %v1083
      %v1541 = vsel %vm1532, %v1508, %v1085
      %v1542 = vsel %vm1532, %v1509, %v1087
      %v1543 = vsel %vm1532, %v1510, %v1089
      %v1544 = vsel %vm1532, %v1511, %v1091
      %v1545 = vsel %vm1532, %v1512, %v1093
      %v1546 = vsel %vm1532, %v1513, %v1095
      %v1547 = vsel %vm1532, %v1514, %v1097
      %v1548 = vsel %vm1532, %v1515, %v1099
      %v1549 = vsel %vm1532, %v1516, %v1101
      %v1550 = vsel %vm1532, %v1517, %v1103
      %v1551 = vsel %vm1532, %v1518, %v1105
      %v1552 = vsel %vm1532, %v1519, %v1107
      %v1553 = vsel %vm1532, %v1520, %v1109
      %v1554 = vsel %vm1532, %v1521, %v1111
      %v1555 = vsel %vm1532, %v1522, %v1113
      %v1556 = vsel %vm1532, %v1523, %v1115
      %v1557 = vsel %vm1532, %v1524, %v1117
      %v1558 = vsel %vm1532, %v1525, %v1119
      %v1559 = vsel %vm1532, %v1526, %v1121
      %v1560 = vsel %vm1532, %v1527, %v1123
      %v1561 = vsel %vm1532, %v1528, %v1125
      %v1562 = vsel %vm1532, %v1529, %v1127
      %v1563 = vsel %vm1532, %v1530, %v1129
      %v1564 = vsel %vm1532, %v1531, %v1131
      %vm1565 = vcmask 228352
      %v1566 = vsel %vm1565, %v1533, %v1171
      %v1567 = vsel %vm1565, %v1534, %v1173
      %v1568 = vsel %vm1565, %v1535, %v1175
      %v1569 = vsel %vm1565, %v1536, %v1177
      %v1570 = vsel %vm1565, %v1537, %v1179
      %v1571 = vsel %vm1565, %v1538, %v1181
      %v1572 = vsel %vm1565, %v1539, %v1183
      %v1573 = vsel %vm1565, %v1540, %v1185
      %v1574 = vsel %vm1565, %v1541, %v1187
      %v1575 = vsel %vm1565, %v1542, %v1189
      %v1576 = vsel %vm1565, %v1543, %v1191
      %v1577 = vsel %vm1565, %v1544, %v1193
      %v1578 = vsel %vm1565, %v1545, %v1195
      %v1579 = vsel %vm1565, %v1546, %v1197
      %v1580 = vsel %vm1565, %v1547, %v1199
      %v1581 = vsel %vm1565, %v1548, %v1201
      %v1582 = vsel %vm1565, %v1549, %v1203
      %v1583 = vsel %vm1565, %v1550, %v1205
      %v1584 = vsel %vm1565, %v1551, %v1207
      %v1585 = vsel %vm1565, %v1552, %v1209
      %v1586 = vsel %vm1565, %v1553, %v1211
      %v1587 = vsel %vm1565, %v1554, %v1213
      %v1588 = vsel %vm1565, %v1555, %v1215
      %v1589 = vsel %vm1565, %v1556, %v1217
      %v1590 = vsel %vm1565, %v1557, %v1219
      %v1591 = vsel %vm1565, %v1558, %v1221
      %v1592 = vsel %vm1565, %v1559, %v1223
      %v1593 = vsel %vm1565, %v1560, %v1225
      %v1594 = vsel %vm1565, %v1561, %v1227
      %v1595 = vsel %vm1565, %v1562, %v1229
      %v1596 = vsel %vm1565, %v1563, %v1231
      %v1597 = vsel %vm1565, %v1564, %v1233
      %vm1598 = vcmask 261120
      %v1599 = vsel %vm1598, %v1566, %v1272
      %v1600 = vsel %vm1598, %v1567, %v1274
      %v1601 = vsel %vm1598, %v1568, %v1276
      %v1602 = vsel %vm1598, %v1569, %v1278
      %v1603 = vsel %vm1598, %v1570, %v1280
      %v1604 = vsel %vm1598, %v1571, %v1282
      %v1605 = vsel %vm1598, %v1572, %v1284
      %v1606 = vsel %vm1598, %v1573, %v1286
      %v1607 = vsel %vm1598, %v1574, %v1288
      %v1608 = vsel %vm1598, %v1575, %v1290
      %v1609 = vsel %vm1598, %v1576, %v1292
      %v1610 = vsel %vm1598, %v1577, %v1294
      %v1611 = vsel %vm1598, %v1578, %v1296
      %v1612 = vsel %vm1598, %v1579, %v1298
      %v1613 = vsel %vm1598, %v1580, %v1300
      %v1614 = vsel %vm1598, %v1581, %v1302
      %v1615 = vsel %vm1598, %v1582, %v1304
      %v1616 = vsel %vm1598, %v1583, %v1306
      %v1617 = vsel %vm1598, %v1584, %v1308
      %v1618 = vsel %vm1598, %v1585, %v1310
      %v1619 = vsel %vm1598, %v1586, %v1312
      %v1620 = vsel %vm1598, %v1587, %v1314
      %v1621 = vsel %vm1598, %v1588, %v1316
      %v1622 = vsel %vm1598, %v1589, %v1318
      %v1623 = vsel %vm1598, %v1590, %v1320
      %v1624 = vsel %vm1598, %v1591, %v1322
      %v1625 = vsel %vm1598, %v1592, %v1324
      %v1626 = vsel %vm1598, %v1593, %v1326
      %v1627 = vsel %vm1598, %v1594, %v1328
      %v1628 = vsel %vm1598, %v1595, %v1330
      %v1629 = vsel %vm1598, %v1596, %v1332
      %v1630 = vsel %vm1598, %v1597, %v1334
      %v1631 = vld [vmem:[%s286] sm:$0xff]
      %v1632 = vld [vmem:[%s286 + $0x8] sm:$0xff]
      %v1633 = vld [vmem:[%s286 + $0x10] sm:$0xff]
      %v1634 = vld [vmem:[%s286 + $0x18] sm:$0xff]
      %v1635 = vld [vmem:[%s286 + $0x20] sm:$0xf]
      %v1636 = vld [vmem:[%s292] sm:$0x1]
      %v1638 = vlaneseq
      %v1639 = vshrl.u32 %v1638, 7
      %v1640 = vsub.s32 0, %v1639
      %v1641 = vrot.slane %v1636, %v1640
      %vm1643 = vcmask 293888
      %v1645 = vsel %vm1643, %v1599, 0
      %v1648 = vsel %vm1643, %v1600, 0
      %v1651 = vsel %vm1643, %v1601, 0
      %v1654 = vsel %vm1643, %v1602, 0
      %v1657 = vsel %vm1643, %v1603, 0
      %v1660 = vsel %vm1643, %v1604, 0
      %v1663 = vsel %vm1643, %v1605, 0
      %v1666 = vsel %vm1643, %v1606, 0
      %v1669 = vsel %vm1643, %v1607, 0
      %v1672 = vsel %vm1643, %v1608, 0
      %v1675 = vsel %vm1643, %v1609, 0
      %v1678 = vsel %vm1643, %v1610, 0
      %v1681 = vsel %vm1643, %v1611, 0
      %v1684 = vsel %vm1643, %v1612, 0
      %v1687 = vsel %vm1643, %v1613, 0
      %v1690 = vsel %vm1643, %v1614, 0
      %v1693 = vsel %vm1643, %v1615, 0
      %v1696 = vsel %vm1643, %v1616, 0
      %v1699 = vsel %vm1643, %v1617, 0
      %v1702 = vsel %vm1643, %v1618, 0
      %v1705 = vsel %vm1643, %v1619, 0
      %v1708 = vsel %vm1643, %v1620, 0
      %v1711 = vsel %vm1643, %v1621, 0
      %v1714 = vsel %vm1643, %v1622, 0
      %v1717 = vsel %vm1643, %v1623, 0
      %v1720 = vsel %vm1643, %v1624, 0
      %v1723 = vsel %vm1643, %v1625, 0
      %v1726 = vsel %vm1643, %v1626, 0
      %v1729 = vsel %vm1643, %v1627, 0
      %v1732 = vsel %vm1643, %v1628, 0
      %v1735 = vsel %vm1643, %v1629, 0
      %v1738 = vsel %vm1643, %v1630, 0
      %vm1740 = vcmask 1043456
      %v1742 = vsel %vm1740, %v1635, 0
      %1744 = vmatprep.subr.mxu0 0.0
      %1745 = vmatpush1.msra.mxu0 %v1631
      %1746 = vmatprep.subr.mxu0 0.0
      %1747 = vmatpush1.msra.mxu0 %v1632
      %1748 = vmatprep.subr.mxu0 0.0
      %1749 = vmatpush1.msra.mxu0 %v1633
      %1750 = vmatprep.subr.mxu0 0.0
      %1751 = vmatpush1.msra.mxu0 %v1634
      %1752 = vmatprep.subr.mxu0 0.0
      %1753 = vmatpush1.msra.mxu0 %v1742
      %1754 = vmatprep.subr.mxu0 0.0
      %1755 = vmatpush1.msra.mxu0 0.0
      %1756 = vmatprep.subr.mxu0 0.0
      %1757 = vmatpush1.msra.mxu0 0.0
      %1758 = vmatprep.subr.mxu0 0.0
      %1759 = vmatpush1.msra.mxu0 0.0
      %1760 = vmatprep.subr.mxu0 0.0
      %1761 = vmatpush1.msra.mxu0 0.0
      %1762 = vmatprep.subr.mxu0 0.0
      %1763 = vmatpush1.msra.mxu0 0.0
      %1764 = vmatprep.subr.mxu0 0.0
      %1765 = vmatpush1.msra.mxu0 0.0
      %1766 = vmatprep.subr.mxu0 0.0
      %1767 = vmatpush1.msra.mxu0 0.0
      %1768 = vmatprep.subr.mxu0 0.0
      %1769 = vmatpush1.msra.mxu0 0.0
      %1770 = vmatprep.subr.mxu0 0.0
      %1771 = vmatpush1.msra.mxu0 0.0
      %1772 = vmatprep.subr.mxu0 0.0
      %1773 = vmatpush1.msra.mxu0 0.0
      %1774 = vmatprep.subr.mxu0 0.0
      %1775 = vmatpush1.msra.mxu0 0.0
      %1776 = vmatprep.subr.mxu0 0.0
      %1777 = vmatpush1.msra.mxu0 0.0
      %1778 = vmatprep.subr.mxu0 0.0
      %1779 = vmatpush1.msra.mxu0 0.0
      %1780 = vmatprep.subr.mxu0 0.0
      %1781 = vmatpush1.msra.mxu0 0.0
      %1782 = vmatprep.subr.mxu0 0.0
      %1783 = vmatpush1.msra.mxu0 0.0
      %1784 = vmatprep.subr.mxu0 0.0
      %1785 = vmatpush1.msra.mxu0 0.0
      %1786 = vmatprep.subr.mxu0 0.0
      %1787 = vmatpush1.msra.mxu0 0.0
      %1788 = vmatprep.subr.mxu0 0.0
      %1789 = vmatpush1.msra.mxu0 0.0
      %1790 = vmatprep.subr.mxu0 0.0
      %1791 = vmatpush1.msra.mxu0 0.0
      %1792 = vmatprep.subr.mxu0 0.0
      %1793 = vmatpush1.msra.mxu0 0.0
      %1794 = vmatprep.subr.mxu0 0.0
      %1795 = vmatpush1.msra.mxu0 0.0
      %1796 = vmatprep.subr.mxu0 0.0
      %1797 = vmatpush1.msra.mxu0 0.0
      %1798 = vmatprep.subr.mxu0 0.0
      %1799 = vmatpush1.msra.mxu0 0.0
      %1800 = vmatprep.subr.mxu0 0.0
      %1801 = vmatpush1.msra.mxu0 0.0
      %1802 = vmatprep.subr.mxu0 0.0
      %1803 = vmatpush1.msra.mxu0 0.0
      %1804 = vmatprep.subr.mxu0 0.0
      %1805 = vmatpush1.msra.mxu0 0.0
      %1806 = vmatprep.subr.mxu0 0.0
      %1807 = vmatpush1.msra.mxu0 0.0
      %1808 = vmatprep.mubr.f32.mxu0 0.0
      %1809 = vmatmul.mubr.f32.gmra.mrb[0].mxu0 %v1645
      %v1810 = vpop.f32.mrb[0].mxu0
      %v1811 = vadd.f32 %v1641, %v1810
      %v1812 = vpop.f32.mrb[0].mxu0
      %1813 = vmatprep.mubr.f32.mxu0 0.0
      %1814 = vmatmul.mubr.f32.gmra.mrb[0].mxu0 %v1648
      %v1815 = vpop.f32.mrb[0].mxu0
      %v1816 = vadd.f32 %v1641, %v1815
      %v1817 = vpop.f32.mrb[0].mxu0
      %1818 = vmatprep.mubr.f32.mxu0 0.0
      %1819 = vmatmul.mubr.f32.gmra.mrb[0].mxu0 %v1651
      %v1820 = vpop.f32.mrb[0].mxu0
      %v1821 = vadd.f32 %v1641, %v1820
      %v1822 = vpop.f32.mrb[0].mxu0
      %1823 = vmatprep.mubr.f32.mxu0 0.0
      %1824 = vmatmul.mubr.f32.gmra.mrb[0].mxu0 %v1654
      %v1825 = vpop.f32.mrb[0].mxu0
      %v1826 = vadd.f32 %v1641, %v1825
      %v1827 = vpop.f32.mrb[0].mxu0
      %1828 = vmatprep.mubr.f32.mxu0 0.0
      %1829 = vmatmul.mubr.f32.gmra.mrb[0].mxu0 %v1657
      %v1830 = vpop.f32.mrb[0].mxu0
      %v1831 = vadd.f32 %v1641, %v1830
      %v1832 = vpop.f32.mrb[0].mxu0
      %1833 = vmatprep.mubr.f32.mxu0 0.0
      %1834 = vmatmul.mubr.f32.gmra.mrb[0].mxu0 %v1660
      %v1835 = vpop.f32.mrb[0].mxu0
      %v1836 = vadd.f32 %v1641, %v1835
      %v1837 = vpop.f32.mrb[0].mxu0
      %1838 = vmatprep.mubr.f32.mxu0 0.0
      %1839 = vmatmul.mubr.f32.gmra.mrb[0].mxu0 %v1663
      %v1840 = vpop.f32.mrb[0].mxu0
      %v1841 = vadd.f32 %v1641, %v1840
      %v1842 = vpop.f32.mrb[0].mxu0
      %1843 = vmatprep.mubr.f32.mxu0 0.0
      %1844 = vmatmul.mubr.f32.gmra.mrb[0].mxu0 %v1666
      %v1845 = vpop.f32.mrb[0].mxu0
      %v1846 = vadd.f32 %v1641, %v1845
      %v1847 = vpop.f32.mrb[0].mxu0
      %1848 = vmatprep.mubr.f32.mxu0 0.0
      %1849 = vmatmul.mubr.f32.gmra.mrb[0].mxu0 %v1669
      %v1850 = vpop.f32.mrb[0].mxu0
      %v1851 = vadd.f32 %v1641, %v1850
      %v1852 = vpop.f32.mrb[0].mxu0
      %1853 = vmatprep.mubr.f32.mxu0 0.0
      %1854 = vmatmul.mubr.f32.gmra.mrb[0].mxu0 %v1672
      %v1855 = vpop.f32.mrb[0].mxu0
      %v1856 = vadd.f32 %v1641, %v1855
      %v1857 = vpop.f32.mrb[0].mxu0
      %1858 = vmatprep.mubr.f32.mxu0 0.0
      %1859 = vmatmul.mubr.f32.gmra.mrb[0].mxu0 %v1675
      %v1860 = vpop.f32.mrb[0].mxu0
      %v1861 = vadd.f32 %v1641, %v1860
      %v1862 = vpop.f32.mrb[0].mxu0
      %1863 = vmatprep.mubr.f32.mxu0 0.0
      %1864 = vmatmul.mubr.f32.gmra.mrb[0].mxu0 %v1678
      %v1865 = vpop.f32.mrb[0].mxu0
      %v1866 = vadd.f32 %v1641, %v1865
      %v1867 = vpop.f32.mrb[0].mxu0
      %1868 = vmatprep.mubr.f32.mxu0 0.0
      %1869 = vmatmul.mubr.f32.gmra.mrb[0].mxu0 %v1681
      %v1870 = vpop.f32.mrb[0].mxu0
      %v1871 = vadd.f32 %v1641, %v1870
      %v1872 = vpop.f32.mrb[0].mxu0
      %1873 = vmatprep.mubr.f32.mxu0 0.0
      %1874 = vmatmul.mubr.f32.gmra.mrb[0].mxu0 %v1684
      %v1875 = vpop.f32.mrb[0].mxu0
      %v1876 = vadd.f32 %v1641, %v1875
      %v1877 = vpop.f32.mrb[0].mxu0
      %1878 = vmatprep.mubr.f32.mxu0 0.0
      %1879 = vmatmul.mubr.f32.gmra.mrb[0].mxu0 %v1687
      %v1880 = vpop.f32.mrb[0].mxu0
      %v1881 = vadd.f32 %v1641, %v1880
      %v1882 = vpop.f32.mrb[0].mxu0
      %1883 = vmatprep.mubr.f32.mxu0 0.0
      %1884 = vmatmul.mubr.f32.gmra.mrb[0].mxu0 %v1690
      %v1885 = vpop.f32.mrb[0].mxu0
      %v1886 = vadd.f32 %v1641, %v1885
      %v1887 = vpop.f32.mrb[0].mxu0
      %1888 = vmatprep.mubr.f32.mxu0 0.0
      %1889 = vmatmul.mubr.f32.gmra.mrb[0].mxu0 %v1693
      %v1890 = vpop.f32.mrb[0].mxu0
      %v1891 = vadd.f32 %v1641, %v1890
      %v1892 = vpop.f32.mrb[0].mxu0
      %1893 = vmatprep.mubr.f32.mxu0 0.0
      %1894 = vmatmul.mubr.f32.gmra.mrb[0].mxu0 %v1696
      %v1895 = vpop.f32.mrb[0].mxu0
      %v1896 = vadd.f32 %v1641, %v1895
      %v1897 = vpop.f32.mrb[0].mxu0
      %1898 = vmatprep.mubr.f32.mxu0 0.0
      %1899 = vmatmul.mubr.f32.gmra.mrb[0].mxu0 %v1699
      %v1900 = vpop.f32.mrb[0].mxu0
      %v1901 = vadd.f32 %v1641, %v1900
      %v1902 = vpop.f32.mrb[0].mxu0
      %1903 = vmatprep.mubr.f32.mxu0 0.0
      %1904 = vmatmul.mubr.f32.gmra.mrb[0].mxu0 %v1702
      %v1905 = vpop.f32.mrb[0].mxu0
      %v1906 = vadd.f32 %v1641, %v1905
      %v1907 = vpop.f32.mrb[0].mxu0
      %1908 = vmatprep.mubr.f32.mxu0 0.0
      %1909 = vmatmul.mubr.f32.gmra.mrb[0].mxu0 %v1705
      %v1910 = vpop.f32.mrb[0].mxu0
      %v1911 = vadd.f32 %v1641, %v1910
      %v1912 = vpop.f32.mrb[0].mxu0
      %1913 = vmatprep.mubr.f32.mxu0 0.0
      %1914 = vmatmul.mubr.f32.gmra.mrb[0].mxu0 %v1708
      %v1915 = vpop.f32.mrb[0].mxu0
      %v1916 = vadd.f32 %v1641, %v1915
      %v1917 = vpop.f32.mrb[0].mxu0
      %1918 = vmatprep.mubr.f32.mxu0 0.0
      %1919 = vmatmul.mubr.f32.gmra.mrb[0].mxu0 %v1711
      %v1920 = vpop.f32.mrb[0].mxu0
      %v1921 = vadd.f32 %v1641, %v1920
      %v1922 = vpop.f32.mrb[0].mxu0
      %1923 = vmatprep.mubr.f32.mxu0 0.0
      %1924 = vmatmul.mubr.f32.gmra.mrb[0].mxu0 %v1714
      %v1925 = vpop.f32.mrb[0].mxu0
      %v1926 = vadd.f32 %v1641, %v1925
      %v1927 = vpop.f32.mrb[0].mxu0
      %1928 = vmatprep.mubr.f32.mxu0 0.0
      %1929 = vmatmul.mubr.f32.gmra.mrb[0].mxu0 %v1717
      %v1930 = vpop.f32.mrb[0].mxu0
      %v1931 = vadd.f32 %v1641, %v1930
      %v1932 = vpop.f32.mrb[0].mxu0
      %1933 = vmatprep.mubr.f32.mxu0 0.0
      %1934 = vmatmul.mubr.f32.gmra.mrb[0].mxu0 %v1720
      %v1935 = vpop.f32.mrb[0].mxu0
      %v1936 = vadd.f32 %v1641, %v1935
      %v1937 = vpop.f32.mrb[0].mxu0
      %1938 = vmatprep.mubr.f32.mxu0 0.0
      %1939 = vmatmul.mubr.f32.gmra.mrb[0].mxu0 %v1723
      %v1940 = vpop.f32.mrb[0].mxu0
      %v1941 = vadd.f32 %v1641, %v1940
      %v1942 = vpop.f32.mrb[0].mxu0
      %1943 = vmatprep.mubr.f32.mxu0 0.0
      %1944 = vmatmul.mubr.f32.gmra.mrb[0].mxu0 %v1726
      %v1945 = vpop.f32.mrb[0].mxu0
      %v1946 = vadd.f32 %v1641, %v1945
      %v1947 = vpop.f32.mrb[0].mxu0
      %1948 = vmatprep.mubr.f32.mxu0 0.0
      %1949 = vmatmul.mubr.f32.gmra.mrb[0].mxu0 %v1729
      %v1950 = vpop.f32.mrb[0].mxu0
      %v1951 = vadd.f32 %v1641, %v1950
      %v1952 = vpop.f32.mrb[0].mxu0
      %1953 = vmatprep.mubr.f32.mxu0 0.0
      %1954 = vmatmul.mubr.f32.gmra.mrb[0].mxu0 %v1732
      %v1955 = vpop.f32.mrb[0].mxu0
      %v1956 = vadd.f32 %v1641, %v1955
      %v1957 = vpop.f32.mrb[0].mxu0
      %1958 = vmatprep.mubr.f32.mxu0 0.0
      %1959 = vmatmul.mubr.f32.gmra.mrb[0].mxu0 %v1735
      %v1960 = vpop.f32.mrb[0].mxu0
      %v1961 = vadd.f32 %v1641, %v1960
      %v1962 = vpop.f32.mrb[0].mxu0
      %1963 = vmatprep.mubr.f32.mxu0 0.0
      %1964 = vmatmul.mubr.f32.gmra.mrb[0].mxu0 %v1738
      %v1965 = vpop.f32.mrb[0].mxu0
      %v1966 = vadd.f32 %v1641, %v1965
      %v1967 = vpop.f32.mrb[0].mxu0
      %1968 = vdwg.mxu0
      %1969 = vst [vmem:[%s308] sm:$0xff] %v1811
      %1970 = vst [vmem:[%s308 + $0x8] sm:$0xff] %v1816
      %1971 = vst [vmem:[%s308 + $0x10] sm:$0xff] %v1821
      %1972 = vst [vmem:[%s308 + $0x18] sm:$0xff] %v1826
      %1973 = vst [vmem:[%s308 + $0x20] sm:$0xff] %v1831
      %1974 = vst [vmem:[%s308 + $0x28] sm:$0xff] %v1836
      %1975 = vst [vmem:[%s308 + $0x30] sm:$0xff] %v1841
      %1976 = vst [vmem:[%s308 + $0x38] sm:$0xff] %v1846
      %1977 = vst [vmem:[%s308 + $0x40] sm:$0xff] %v1851
      %1978 = vst [vmem:[%s308 + $0x48] sm:$0xff] %v1856
      %1979 = vst [vmem:[%s308 + $0x50] sm:$0xff] %v1861
      %1980 = vst [vmem:[%s308 + $0x58] sm:$0xff] %v1866
      %1981 = vst [vmem:[%s308 + $0x60] sm:$0xff] %v1871
      %1982 = vst [vmem:[%s308 + $0x68] sm:$0xff] %v1876
      %1983 = vst [vmem:[%s308 + $0x70] sm:$0xff] %v1881
      %1984 = vst [vmem:[%s308 + $0x78] sm:$0xff] %v1886
      %1985 = vst [vmem:[%s308 + $0x80] sm:$0xff] %v1891
      %1986 = vst [vmem:[%s308 + $0x88] sm:$0xff] %v1896
      %1987 = vst [vmem:[%s308 + $0x90] sm:$0xff] %v1901
      %1988 = vst [vmem:[%s308 + $0x98] sm:$0xff] %v1906
      %1989 = vst [vmem:[%s308 + $0xa0] sm:$0xff] %v1911
      %1990 = vst [vmem:[%s308 + $0xa8] sm:$0xff] %v1916
      %1991 = vst [vmem:[%s308 + $0xb0] sm:$0xff] %v1921
      %1992 = vst [vmem:[%s308 + $0xb8] sm:$0xff] %v1926
      %1993 = vst [vmem:[%s308 + $0xc0] sm:$0xff] %v1931
      %1994 = vst [vmem:[%s308 + $0xc8] sm:$0xff] %v1936
      %1995 = vst [vmem:[%s308 + $0xd0] sm:$0xff] %v1941
      %1996 = vst [vmem:[%s308 + $0xd8] sm:$0xff] %v1946
      %1997 = vst [vmem:[%s308 + $0xe0] sm:$0xff] %v1951
      %1998 = vst [vmem:[%s308 + $0xe8] sm:$0xff] %v1956
      %1999 = vst [vmem:[%s308 + $0xf0] sm:$0xff] %v1961
      %2000 = vst [vmem:[%s308 + $0xf8] sm:$0xff] %v1966
      %p2001 = scmp.lt.s32.totalorder %s20, 0
      %s2002 = scalar_select %p2001, %s20, 0
      %p2003 = scmp.lt.s32.totalorder %s22, 1
      %s2004 = scalar_select %p2003, %s22, 1
      %p2005 = scmp.lt.s32.totalorder %s23, 0
      %s2006 = scalar_select %p2005, %s23, 0
      %p2007 = scmp.lt.s32.totalorder %s21, 0
      %s2008 = scalar_select %p2007, %s21, 0
      %s2009 = smul.addr %s2006, 32
      %s2010 = sadd.s32 %s2008, %s2009
      %s2011 = smul.addr %s2004, 32
      %s2012 = sadd.s32 %s2010, %s2011
      %s2013 = smul.addr %s2002, 64
      %s2014 = sadd.s32 %s2012, %s2013
      %s2015 = smul.addr %s2014, 8
      %s2016 = scalar_lea.vmem %s3, %s2015
      // Predicated region
      $region33: #{conv2d_forward.1} parent=31 // pred_check
        %p2017 = pneg %p150
      $region34: #{conv2d_forward.1} parent=31 // pred_check_branch
        %2019 = sbr.rel (%p2017) target = $region36
      $region35: #{conv2d_forward.1} parent=31 // pred_region
        _
      $region36: #{conv2d_forward.1} parent=31 // pred_fallthru
        _
    $region32: #{conv2d_forward.1} parent=5 // pred_fallthru
      _
    %p2020 = scmp.le.s32.totalorder 2, %s9
    // Predicated region
    $region37: #{conv2d_forward.1} parent=5 // pred_check
      %p2021 = pneg %p2020
    $region38: #{conv2d_forward.1} parent=5 // pred_check_branch
      %2023 = sbr.rel (%p2021) target = $region40
    $region39: #{conv2d_forward.1} parent=5 // pred_region
      %s2024 = ssub.s32 %s9, 2
      // Predicated region
      $region41: #{conv2d_forward.1} parent=39 // pred_check
        %p2025 = pneg %p156
      $region42: #{conv2d_forward.1} parent=39 // pred_check_branch
        %2027 = sbr.rel (%p2025) target = $region44
      $region43: #{conv2d_forward.1} parent=39 // pred_region
        %p2028 = scmp.lt.s32.totalorder %s24, 0
        %s2029 = scalar_select %p2028, %s24, 0
        %p2030 = scmp.lt.s32.totalorder %s26, 1
        %s2031 = scalar_select %p2030, %s26, 1
        %p2032 = scmp.lt.s32.totalorder %s27, 0
        %s2033 = scalar_select %p2032, %s27, 0
        %p2034 = scmp.lt.s32.totalorder %s25, 0
        %s2035 = scalar_select %p2034, %s25, 0
        %s2036 = smul.addr %s2033, 32
        %s2037 = sadd.s32 %s2035, %s2036
        %s2038 = smul.addr %s2031, 32
        %s2039 = sadd.s32 %s2037, %s2038
        %s2040 = smul.addr %s2029, 64
        %s2041 = sadd.s32 %s2039, %s2040
        %s2042 = smul.addr %s2041, 8
        %s2043 = scalar_lea.vmem %s3, %s2042
      $region44: #{conv2d_forward.1} parent=39 // pred_fallthru
        _
    $region40: #{conv2d_forward.1} parent=5 // pred_fallthru
      _
  $region6: #{conv2d_forward.1} parent=0 // loop_footer
    %s13 = sadd.s32 1, %s9
  $region7: #{conv2d_forward.1} parent=0 // loop_footer_branch
    %8 = sbr.rel target = $region3
  $region8: #{conv2d_forward.1} parent=0 // loop_exit
    _

</llo_original>
